<compile_context>
chip_gen: v5e
topology: v5e:2x2
jax: 0.10.0
libtpu: 0.0.40
codegen_flags: <defaults>
</compile_context>

<pallas_src>
import functools

import jax
import jax.numpy as jnp
from jax.experimental import pallas as pl
from jax.experimental.pallas import tpu as pltpu

EPS = 1e-5
NEG_SLOPE = 0.1
LANE = 128


def _round_up(x, m):
    return (x + m - 1) // m * m


def _leaky(x):
    return jnp.where(x > 0, x, NEG_SLOPE * x)


# --------------------------------------------------------------------------
# pass 1: 1x1 conv (matmul) + per-channel sum / sum-of-squares accumulation
# --------------------------------------------------------------------------
def _conv1_stats_kernel(x_ref, w_ref, y_ref, s_ref):
    i = pl.program_id(0)
    y = jnp.dot(x_ref[...], w_ref[...], preferred_element_type=jnp.float32)

    @pl.when(i == 0)
    def _init():
        s_ref[...] = jnp.zeros_like(s_ref)

    s_ref[...] += jnp.concatenate(
        [jnp.sum(y, axis=0, keepdims=True),
         jnp.sum(y * y, axis=0, keepdims=True)], axis=0)
    y_ref[...] = y.astype(y_ref.dtype)


# --------------------------------------------------------------------------
# pass 2: BN1-apply + LeakyReLU + 3x3 conv (single K=9*Cmid matmul) + BN2 stats
# --------------------------------------------------------------------------
def _make_conv2_kernel(tile_h, H, W, cmid_p, c_p, compute_dtype):
    def kernel(ypad_ref, sc_ref, sh_ref, w2_ref, z_ref, s_ref, buf, sem):
        n = pl.program_id(0)
        h = pl.program_id(1)

        # Manual halo DMA: padded rows [h*tile_h, h*tile_h + tile_h + 2) of
        # image n.  BlockSpec cannot express overlapping (halo) windows, so
        # this input lives in pl.ANY (HBM) and is copied explicitly to VMEM.
        start = pl.multiple_of(h * tile_h, tile_h)
        cp = pltpu.make_async_copy(
            ypad_ref.at[n, pl.ds(start, tile_h + 2)], buf, sem)
        cp.start()
        cp.wait()

        # BN1 (folded scale/shift) + LeakyReLU on the raw conv1 output (f32).
        a = (buf[...].astype(jnp.float32) * sc_ref[...].reshape(1, 1, cmid_p)
             + sh_ref[...].reshape(1, 1, cmid_p))
        a = _leaky(a)

        # conv2's spatial zero-padding ring: BN+LeakyReLU of a padded zero is
        # NOT zero, so mask the ring back to exact zeros.
        shp = (tile_h + 2, W + 2, cmid_p)
        row = jax.lax.broadcasted_iota(jnp.int32, shp, 0) + h * tile_h
        col = jax.lax.broadcasted_iota(jnp.int32, shp, 1)
        valid = (row >= 1) & (row <= H) & (col >= 1) & (col <= W)
        a = jnp.where(valid, a, 0.0).astype(compute_dtype)

        # 3x3 conv as ONE matmul: 9 shifted taps built in VMEM (static slices
        # of the halo band) -> (tile_h*W, 9*cmid_p) @ (9*cmid_p, c_p).
        taps = jnp.concatenate(
            [a[kh:kh + tile_h, kw:kw + W, :]
             for kh in range(3) for kw in range(3)], axis=-1)
        z = jnp.dot(taps.reshape(tile_h * W, 9 * cmid_p), w2_ref[...],
                    preferred_element_type=jnp.float32)

        @pl.when((n == 0) & (h == 0))
        def _init():
            s_ref[...] = jnp.zeros_like(s_ref)

        s_ref[...] += jnp.concatenate(
            [jnp.sum(z, axis=0, keepdims=True),
             jnp.sum(z * z, axis=0, keepdims=True)], axis=0)
        z_ref[...] = z.reshape(1, tile_h, W, c_p).astype(z_ref.dtype)

    return kernel


# --------------------------------------------------------------------------
# pass 3: BN2-apply + LeakyReLU + residual add
# --------------------------------------------------------------------------
def _bn_lrelu_residual_kernel(z_ref, x_ref, sc_ref, sh_ref, o_ref):
    z = z_ref[...].astype(jnp.float32) * sc_ref[...] + sh_ref[...]
    o_ref[...] = (x_ref[...].astype(jnp.float32) + _leaky(z)).astype(o_ref.dtype)


def _folded_bn(stats, gamma, beta, count):
    """Fold global batch statistics + gamma/beta into per-channel scale/shift."""
    mean = stats[0:1] / count
    var = jnp.maximum(stats[1:2] / count - mean * mean, 0.0)
    scale = gamma * jax.lax.rsqrt(var + EPS)
    shift = beta - mean * scale
    return scale, shift


@functools.partial(jax.jit, static_argnames=("tile_m", "tile_h", "compute_dtype"))
def residual_forward(x_nchw, params, *, tile_m=128, tile_h=8,
                     compute_dtype=jnp.float32):
    """x_nchw: (N, C, H, W) float32.  Returns (N, C, H, W) float32.

    tile_m / tile_h are VMEM-budget knobs: for real darknet shapes use
    tile_m ~1024-4096 (v5e/v6e, 128 MiB VMEM) or ~512-2048 (v7x, 64 MiB),
    and compute_dtype=jnp.bfloat16 on v6e/v7x for MXU peak / half DMA bytes.
    """
    N, C, H, W = x_nchw.shape
    cmid = C // 2
    M = N * H * W
    c_p = _round_up(C, LANE)        # lane-dense channel padding
    cmid_p = _round_up(cmid, LANE)

    tile_m = min(tile_m, M)
    tile_h = min(tile_h, H)
    assert M % tile_m == 0 and tile_m % 8 == 0, "tile_m must divide M (mult of 8)"
    assert H % tile_h == 0, "tile_h must divide H"

    cdt = compute_dtype

    # ---- channels-last, lane-padded layout --------------------------------
    x2d = jnp.transpose(x_nchw, (0, 2, 3, 1)).reshape(M, C)
    x2d_p = jnp.pad(x2d, ((0, 0), (0, c_p - C)))

    w1_p = jnp.pad(params["w1"], ((0, c_p - C), (0, cmid_p - cmid)))
    g1_p = jnp.pad(params["gamma1"], ((0, 0), (0, cmid_p - cmid)))
    b1_p = jnp.pad(params["beta1"], ((0, 0), (0, cmid_p - cmid)))
    w2_p = jnp.pad(params["w2"],
                   ((0, 0), (0, 0), (0, cmid_p - cmid), (0, c_p - C)))
    w2_mat = w2_p.reshape(9 * cmid_p, c_p)          # (kh, kw, cin)-major rows
    g2_p = jnp.pad(params["gamma2"], ((0, 0), (0, c_p - C)))
    b2_p = jnp.pad(params["beta2"], ((0, 0), (0, c_p - C)))

    # ---- pass 1: 1x1 conv + BN1 batch-stat accumulation --------------------
    y2d, stats1 = pl.pallas_call(
        _conv1_stats_kernel,
        grid=(M // tile_m,),
        in_specs=[pl.BlockSpec((tile_m, c_p), lambda i: (i, 0)),
                  pl.BlockSpec((c_p, cmid_p), lambda i: (0, 0))],
        out_specs=[pl.BlockSpec((tile_m, cmid_p), lambda i: (i, 0)),
                   pl.BlockSpec((2, cmid_p), lambda i: (0, 0))],
        out_shape=[jax.ShapeDtypeStruct((M, cmid_p), cdt),
                   jax.ShapeDtypeStruct((2, cmid_p), jnp.float32)],
        compiler_params=pltpu.CompilerParams(
            dimension_semantics=("arbitrary",)),    # stats accumulate over M
    )(x2d_p.astype(cdt), w1_p.astype(cdt))

    scale1, shift1 = _folded_bn(stats1, g1_p, b1_p, float(M))

    # Spatial zero padding for the 3x3 conv (one cheap HBM copy); conv2 then
    # only reads each padded row's halo band via DMA (no 9x patch traffic).
    ypad = jnp.pad(y2d.reshape(N, H, W, cmid_p),
                   ((0, 0), (1, 1), (1, 1), (0, 0)))

    # ---- pass 2: BN1-apply + LeakyReLU + 3x3 conv + BN2 stats --------------
    conv2_kernel = _make_conv2_kernel(tile_h, H, W, cmid_p, c_p, cdt)
    z4d, stats2 = pl.pallas_call(
        conv2_kernel,
        grid=(N, H // tile_h),
        in_specs=[pl.BlockSpec(memory_space=pl.ANY),               # ypad (HBM)
                  pl.BlockSpec((1, cmid_p), lambda n, h: (0, 0)),   # scale1
                  pl.BlockSpec((1, cmid_p), lambda n, h: (0, 0)),   # shift1
                  pl.BlockSpec((9 * cmid_p, c_p), lambda n, h: (0, 0))],
        out_specs=[pl.BlockSpec((1, tile_h, W, c_p), lambda n, h: (n, h, 0, 0)),
                   pl.BlockSpec((2, c_p), lambda n, h: (0, 0))],
        out_shape=[jax.ShapeDtypeStruct((N, H, W, c_p), cdt),
                   jax.ShapeDtypeStruct((2, c_p), jnp.float32)],
        scratch_shapes=[pltpu.VMEM((tile_h + 2, W + 2, cmid_p), cdt),
                        pltpu.SemaphoreType.DMA(())],
        compiler_params=pltpu.CompilerParams(
            dimension_semantics=("arbitrary", "arbitrary")),
    )(ypad, scale1, shift1, w2_mat.astype(cdt))

    scale2, shift2 = _folded_bn(stats2, g2_p, b2_p, float(M))

    # ---- pass 3: BN2-apply + LeakyReLU + residual add -----------------------
    out2d = pl.pallas_call(
        _bn_lrelu_residual_kernel,
        grid=(M // tile_m,),
        in_specs=[pl.BlockSpec((tile_m, c_p), lambda i: (i, 0)),
                  pl.BlockSpec((tile_m, c_p), lambda i: (i, 0)),
                  pl.BlockSpec((1, c_p), lambda i: (0, 0)),
                  pl.BlockSpec((1, c_p), lambda i: (0, 0))],
        out_specs=pl.BlockSpec((tile_m, c_p), lambda i: (i, 0)),
        out_shape=jax.ShapeDtypeStruct((M, c_p), jnp.float32),
        compiler_params=pltpu.CompilerParams(
            dimension_semantics=("parallel",)),
    )(z4d.reshape(M, c_p), x2d_p, scale2, shift2)

    out = out2d[:, :C].reshape(N, H, W, C)
    return jnp.transpose(out, (0, 3, 1, 2))  # back to NCHW


def _ref_forward(x_nchw, params):
    """Pure-JAX reference (lax.conv) for correctness checking."""
    N, C, H, W = x_nchw.shape
    cmid = C // 2
    x = jnp.transpose(x_nchw, (0, 2, 3, 1))

    def bn_lrelu(y, g, b):
        mean = jnp.mean(y, axis=(0, 1, 2), keepdims=True)
        var = jnp.mean((y - mean) ** 2, axis=(0, 1, 2), keepdims=True)
        z = (y - mean) / jnp.sqrt(var + EPS) * g.reshape(1, 1, 1, -1) \
            + b.reshape(1, 1, 1, -1)
        return jnp.where(z > 0, z, NEG_SLOPE * z)

    y = jax.lax.conv_general_dilated(
        x, params["w1"].reshape(1, 1, C, cmid), (1, 1), "VALID",
        dimension_numbers=("NHWC", "HWIO", "NHWC"))
    y = bn_lrelu(y, params["gamma1"], params["beta1"])
    y2 = jax.lax.conv_general_dilated(
        y, params["w2"], (1, 1), "SAME",
        dimension_numbers=("NHWC", "HWIO", "NHWC"))
    y2 = bn_lrelu(y2, params["gamma2"], params["beta2"])
    return jnp.transpose(x + y2, (0, 3, 1, 2))


if __name__ == "__main__":
    N, C, H, W = 2, 4, 16, 16
    cmid = C // 2

    key = jax.random.PRNGKey(0)
    kx, k1, k2, kg1, kb1, kg2, kb2 = jax.random.split(key, 7)

    x = jax.random.normal(kx, (N, C, H, W), jnp.float32)

    params = {
        # conv1: PyTorch weight (Cmid, C, 1, 1) -> stored as (C, Cmid)
        "w1": 0.1 * jax.random.normal(k1, (C, cmid), jnp.float32),
        "gamma1": 1.0 + 0.1 * jax.random.normal(kg1, (1, cmid), jnp.float32),
        "beta1": 0.1 * jax.random.normal(kb1, (1, cmid), jnp.float32),
        # conv2: PyTorch weight (C, Cmid, 3, 3) -> stored HWIO (3, 3, Cmid, C)
        "w2": 0.1 * jax.random.normal(k2, (3, 3, cmid, C), jnp.float32),
        "gamma2": 1.0 + 0.1 * jax.random.normal(kg2, (1, C), jnp.float32),
        "beta2": 0.1 * jax.random.normal(kb2, (1, C), jnp.float32),
    }

    # f32 path: multi-step grids (M/tile_m = 4, N * H/tile_h = 4) exercise the
    # two-pass BN accumulators; must match the PyTorch/JAX reference tightly.
    out = jax.block_until_ready(
        residual_forward(x, params, tile_m=128, tile_h=8))
    ref = jax.block_until_ready(_ref_forward(x, params))

    assert out.shape == (N, C, H, W)
    assert jnp.allclose(out, ref, rtol=1e-4, atol=1e-4), "f32 mismatch vs JAX reference"

    # bf16 matmul-operand path (v6e/v7x MXU peak, half HBM/VMEM bytes);
    # f32 accumulation + f32 BN epilogues, so only loose agreement is expected.
    out_bf16 = jax.block_until_ready(
        residual_forward(x, params, tile_m=128, tile_h=8,
                         compute_dtype=jnp.bfloat16))
    max_err = float(jnp.max(jnp.abs(out_bf16 - ref)))
    assert max_err < 0.5, f"bf16 path too far off: {max_err}"

    print("KERNEL_OK")
</pallas_src>

<mosaic_0001>
module attributes {stable_mosaic.version = 11 : i64} {
  func.func @_bn_lrelu_residual_kernel(%arg0: i32, %arg1: memref<128x128xf32, #tpu.memory_space<vmem>>, %arg2: memref<128x128xf32, #tpu.memory_space<vmem>>, %arg3: memref<1x128xf32, #tpu.memory_space<vmem>>, %arg4: memref<1x128xf32, #tpu.memory_space<vmem>>, %arg5: memref<128x128xf32, #tpu.memory_space<vmem>>) attributes {dimension_semantics = [#tpu.dimension_semantics<parallel>], iteration_bounds = array<i64: 4>, scalar_prefetch = 0 : i64, scratch_operands = 0 : i64, tpu.core_type = #tpu.core_type<tc>, window_params = [{transform_indices = @transform_0, window_bounds = array<i64: 128, 128>}, {transform_indices = @transform_1, window_bounds = array<i64: 128, 128>}, {pipeline_mode = #tpu.pipeline_mode<synchronous>, transform_indices = @transform_2, window_bounds = array<i64: 1, 128>}, {pipeline_mode = #tpu.pipeline_mode<synchronous>, transform_indices = @transform_3, window_bounds = array<i64: 1, 128>}, {transform_indices = @transform_4, window_bounds = array<i64: 128, 128>}]} {
    %c0 = arith.constant 0 : index
    %c0_0 = arith.constant 0 : index
    %0 = vector.load %arg1[%c0, %c0_0] : memref<128x128xf32, #tpu.memory_space<vmem>>, vector<128x128xf32>
    %c0_1 = arith.constant 0 : index
    %c0_2 = arith.constant 0 : index
    %1 = vector.load %arg3[%c0_1, %c0_2] : memref<1x128xf32, #tpu.memory_space<vmem>>, vector<1x128xf32>
    %2 = vector.broadcast %1 : vector<1x128xf32> to vector<128x128xf32>
    %3 = arith.mulf %0, %2 : vector<128x128xf32>
    %c0_3 = arith.constant 0 : index
    %c0_4 = arith.constant 0 : index
    %4 = vector.load %arg4[%c0_3, %c0_4] : memref<1x128xf32, #tpu.memory_space<vmem>>, vector<1x128xf32>
    %5 = vector.broadcast %4 : vector<1x128xf32> to vector<128x128xf32>
    %6 = arith.addf %3, %5 : vector<128x128xf32>
    %c0_5 = arith.constant 0 : index
    %c0_6 = arith.constant 0 : index
    %7 = vector.load %arg2[%c0_5, %c0_6] : memref<128x128xf32, #tpu.memory_space<vmem>>, vector<128x128xf32>
    %cst = arith.constant 0.000000e+00 : f32
    %8 = vector.broadcast %cst : f32 to vector<128x128xf32>
    %9 = arith.cmpf ogt, %6, %8 : vector<128x128xf32>
    %cst_7 = arith.constant 1.000000e-01 : f32
    %10 = vector.broadcast %cst_7 : f32 to vector<128x128xf32>
    %11 = arith.mulf %10, %6 : vector<128x128xf32>
    %12 = arith.select %9, %6, %11 : vector<128x128xi1>, vector<128x128xf32>
    %13 = arith.addf %7, %12 : vector<128x128xf32>
    %c0_8 = arith.constant 0 : index
    %c0_9 = arith.constant 0 : index
    %14 = vector.load %arg5[%c0_8, %c0_9] : memref<128x128xf32, #tpu.memory_space<vmem>>, vector<128x128xf32>
    tpu.vector_store %arg5[%c0_8, %c0_9], %13 {strides = array<i32>} : memref<128x128xf32, #tpu.memory_space<vmem>>, vector<128x128xf32>,
    return
  }
  func.func @transform_0(%arg0: i32) -> (i32, i32) {
    %c0_i32 = arith.constant 0 : i32
    %c0_i32_0 = arith.constant 0 : i32
    return %arg0, %c0_i32 : i32, i32
  }
  func.func @transform_1(%arg0: i32) -> (i32, i32) {
    %c0_i32 = arith.constant 0 : i32
    %c0_i32_0 = arith.constant 0 : i32
    return %arg0, %c0_i32 : i32, i32
  }
  func.func @transform_2(%arg0: i32) -> (i32, i32) {
    %c0_i32 = arith.constant 0 : i32
    %c0_i32_0 = arith.constant 0 : i32
    %c0_i32_1 = arith.constant 0 : i32
    return %c0_i32, %c0_i32_0 : i32, i32
  }
  func.func @transform_3(%arg0: i32) -> (i32, i32) {
    %c0_i32 = arith.constant 0 : i32
    %c0_i32_0 = arith.constant 0 : i32
    %c0_i32_1 = arith.constant 0 : i32
    return %c0_i32, %c0_i32_0 : i32, i32
  }
  func.func @transform_4(%arg0: i32) -> (i32, i32) {
    %c0_i32 = arith.constant 0 : i32
    %c0_i32_0 = arith.constant 0 : i32
    return %arg0, %c0_i32 : i32, i32
  }
}

module attributes {stable_mosaic.version = 11 : i64} {
  func.func @_conv1_stats_kernel(%arg0: i32, %arg1: memref<128x128xf32, #tpu.memory_space<vmem>>, %arg2: memref<128x128xf32, #tpu.memory_space<vmem>>, %arg3: memref<128x128xf32, #tpu.memory_space<vmem>>, %arg4: memref<2x128xf32, #tpu.memory_space<vmem>>) attributes {dimension_semantics = [#tpu.dimension_semantics<arbitrary>], iteration_bounds = array<i64: 4>, scalar_prefetch = 0 : i64, scratch_operands = 0 : i64, tpu.core_type = #tpu.core_type<tc>, window_params = [{transform_indices = @transform_0, window_bounds = array<i64: 128, 128>}, {pipeline_mode = #tpu.pipeline_mode<synchronous>, transform_indices = @transform_1, window_bounds = array<i64: 128, 128>}, {transform_indices = @transform_2, window_bounds = array<i64: 128, 128>}, {pipeline_mode = #tpu.pipeline_mode<synchronous>, transform_indices = @transform_3, window_bounds = array<i64: 2, 128>}]} {
    %c0 = arith.constant 0 : index
    %c0_0 = arith.constant 0 : index
    %0 = vector.load %arg1[%c0, %c0_0] : memref<128x128xf32, #tpu.memory_space<vmem>>, vector<128x128xf32>
    %c0_1 = arith.constant 0 : index
    %c0_2 = arith.constant 0 : index
    %1 = vector.load %arg2[%c0_1, %c0_2] : memref<128x128xf32, #tpu.memory_space<vmem>>, vector<128x128xf32>
    %cst = arith.constant dense<0.000000e+00> : vector<128x128xf32>
    %2 = tpu.matmul %0, %1, %cst {dimension_numbers = #tpu.dot_dimension_numbers<[1], [0], [0], [1], [0, 0, 1, 1], [], []>} : vector<128x128xf32>, vector<128x128xf32>, vector<128x128xf32> -> vector<128x128xf32>
    %c0_i32 = arith.constant 0 : i32
    %3 = arith.cmpi eq, %arg0, %c0_i32 : i32
    %4 = arith.extui %3 : i1 to i32
    %c0_i32_3 = arith.constant 0 : i32
    %5 = arith.cmpi ne, %4, %c0_i32_3 : i32
    scf.if %5 {
      %cst_12 = arith.constant 0.000000e+00 : f32
      %16 = vector.broadcast %cst_12 : f32 to vector<2x128xf32>
      %c0_13 = arith.constant 0 : index
      %c0_14 = arith.constant 0 : index
      %17 = vector.load %arg4[%c0_13, %c0_14] : memref<2x128xf32, #tpu.memory_space<vmem>>, vector<2x128xf32>
      tpu.vector_store %arg4[%c0_13, %c0_14], %16 {strides = array<i32>} : memref<2x128xf32, #tpu.memory_space<vmem>>, vector<2x128xf32>,
    } else {
    }
    %c0_4 = arith.constant 0 : index
    %c0_5 = arith.constant 0 : index
    %6 = vector.load %arg4[%c0_4, %c0_5] : memref<2x128xf32, #tpu.memory_space<vmem>>, vector<2x128xf32>
    %cst_6 = arith.constant dense<0.000000e+00> : vector<128xf32>
    %7 = vector.multi_reduction <add>, %2, %cst_6 [0] : vector<128x128xf32> to vector<128xf32>
    %8 = vector.shape_cast %7 : vector<128xf32> to vector<1x128xf32>
    %9 = arith.mulf %2, %2 : vector<128x128xf32>
    %cst_7 = arith.constant dense<0.000000e+00> : vector<128xf32>
    %10 = vector.multi_reduction <add>, %9, %cst_7 [0] : vector<128x128xf32> to vector<128xf32>
    %11 = vector.shape_cast %10 : vector<128xf32> to vector<1x128xf32>
    %12 = tpu.concatenate %8, %11 in 0 : vector<1x128xf32>, vector<1x128xf32> -> vector<2x128xf32>
    %13 = arith.addf %6, %12 : vector<2x128xf32>
    %c0_8 = arith.constant 0 : index
    %c0_9 = arith.constant 0 : index
    %14 = vector.load %arg4[%c0_8, %c0_9] : memref<2x128xf32, #tpu.memory_space<vmem>>, vector<2x128xf32>
    tpu.vector_store %arg4[%c0_8, %c0_9], %13 {strides = array<i32>} : memref<2x128xf32, #tpu.memory_space<vmem>>, vector<2x128xf32>,
    %c0_10 = arith.constant 0 : index
    %c0_11 = arith.constant 0 : index
    %15 = vector.load %arg3[%c0_10, %c0_11] : memref<128x128xf32, #tpu.memory_space<vmem>>, vector<128x128xf32>
    tpu.vector_store %arg3[%c0_10, %c0_11], %2 {strides = array<i32>} : memref<128x128xf32, #tpu.memory_space<vmem>>, vector<128x128xf32>,
    return
  }
  func.func @transform_0(%arg0: i32) -> (i32, i32) {
    %c0_i32 = arith.constant 0 : i32
    %c0_i32_0 = arith.constant 0 : i32
    return %arg0, %c0_i32 : i32, i32
  }
  func.func @transform_1(%arg0: i32) -> (i32, i32) {
    %c0_i32 = arith.constant 0 : i32
    %c0_i32_0 = arith.constant 0 : i32
    %c0_i32_1 = arith.constant 0 : i32
    return %c0_i32, %c0_i32_0 : i32, i32
  }
  func.func @transform_2(%arg0: i32) -> (i32, i32) {
    %c0_i32 = arith.constant 0 : i32
    %c0_i32_0 = arith.constant 0 : i32
    return %arg0, %c0_i32 : i32, i32
  }
  func.func @transform_3(%arg0: i32) -> (i32, i32) {
    %c0_i32 = arith.constant 0 : i32
    %c0_i32_0 = arith.constant 0 : i32
    %c0_i32_1 = arith.constant 0 : i32
    return %c0_i32, %c0_i32_0 : i32, i32
  }
}

module attributes {stable_mosaic.version = 11 : i64} {
  func.func @kernel(%arg0: i32, %arg1: i32, %arg2: memref<2x18x18x128xf32, #tpu.memory_space<any>>, %arg3: memref<1x128xf32, #tpu.memory_space<vmem>>, %arg4: memref<1x128xf32, #tpu.memory_space<vmem>>, %arg5: memref<1152x128xf32, #tpu.memory_space<vmem>>, %arg6: memref<1x8x16x128xf32, #tpu.memory_space<vmem>>, %arg7: memref<2x128xf32, #tpu.memory_space<vmem>>, %arg8: memref<10x18x128xf32, #tpu.memory_space<vmem>>, %arg9: memref<!tpu.dma_semaphore, #tpu.memory_space<semaphore_mem>>) attributes {dimension_semantics = [#tpu.dimension_semantics<arbitrary>, #tpu.dimension_semantics<arbitrary>], iteration_bounds = array<i64: 2, 2>, scalar_prefetch = 0 : i64, scratch_operands = 2 : i64, tpu.core_type = #tpu.core_type<tc>, window_params = [{}, {pipeline_mode = #tpu.pipeline_mode<synchronous>, transform_indices = @transform_1, window_bounds = array<i64: 1, 128>}, {pipeline_mode = #tpu.pipeline_mode<synchronous>, transform_indices = @transform_2, window_bounds = array<i64: 1, 128>}, {pipeline_mode = #tpu.pipeline_mode<synchronous>, transform_indices = @transform_3, window_bounds = array<i64: 1152, 128>}, {transform_indices = @transform_4, window_bounds = array<i64: 1, 8, 16, 128>}, {pipeline_mode = #tpu.pipeline_mode<synchronous>, transform_indices = @transform_5, window_bounds = array<i64: 2, 128>}]} {
    %c8_i32 = arith.constant 8 : i32
    %0 = arith.muli %arg1, %c8_i32 : i32
    %1 = tpu.assume_multiple %0, 8 : i32
    %c0_i32 = arith.constant 0 : i32
    %c0_i32_0 = arith.constant 0 : i32
    %2 = tpu.memref_slice %arg2[%arg0, %1, %c0_i32, %c0_i32_0] : memref<2x18x18x128xf32, #tpu.memory_space<any>> -> memref<1x10x18x128xf32, #tpu.memory_space<any>>
    %3 = tpu.memref_squeeze %2 : memref<1x10x18x128xf32, #tpu.memory_space<any>> -> memref<10x18x128xf32, #tpu.memory_space<any>>
    tpu.enqueue_dma source(%3 : memref<10x18x128xf32, #tpu.memory_space<any>>) target(%arg8 : memref<10x18x128xf32, #tpu.memory_space<vmem>>) target_semaphore(%arg9 : memref<!tpu.dma_semaphore, #tpu.memory_space<semaphore_mem>>)
    %c0_i32_1 = arith.constant 0 : i32
    %c0_i32_2 = arith.constant 0 : i32
    %4 = tpu.memref_slice %arg2[%arg0, %1, %c0_i32_1, %c0_i32_2] : memref<2x18x18x128xf32, #tpu.memory_space<any>> -> memref<1x10x18x128xf32, #tpu.memory_space<any>>
    %5 = tpu.memref_squeeze %4 : memref<1x10x18x128xf32, #tpu.memory_space<any>> -> memref<10x18x128xf32, #tpu.memory_space<any>>
    tpu.wait_dma2 semaphore(%arg9 : memref<!tpu.dma_semaphore, #tpu.memory_space<semaphore_mem>>) src(%5 : memref<10x18x128xf32, #tpu.memory_space<any>>) dst(%arg8 : memref<10x18x128xf32, #tpu.memory_space<vmem>>)
    %c0 = arith.constant 0 : index
    %c0_3 = arith.constant 0 : index
    %c0_4 = arith.constant 0 : index
    %6 = vector.load %arg8[%c0, %c0_3, %c0_4] : memref<10x18x128xf32, #tpu.memory_space<vmem>>, vector<10x18x128xf32>
    %c0_5 = arith.constant 0 : index
    %c0_6 = arith.constant 0 : index
    %7 = vector.load %arg3[%c0_5, %c0_6] : memref<1x128xf32, #tpu.memory_space<vmem>>, vector<1x128xf32>
    %8 = vector.shape_cast %7 : vector<1x128xf32> to vector<1x1x128xf32>
    %9 = vector.broadcast %8 : vector<1x1x128xf32> to vector<10x18x128xf32>
    %10 = arith.mulf %6, %9 : vector<10x18x128xf32>
    %c0_7 = arith.constant 0 : index
    %c0_8 = arith.constant 0 : index
    %11 = vector.load %arg4[%c0_7, %c0_8] : memref<1x128xf32, #tpu.memory_space<vmem>>, vector<1x128xf32>
    %12 = vector.shape_cast %11 : vector<1x128xf32> to vector<1x1x128xf32>
    %13 = vector.broadcast %12 : vector<1x1x128xf32> to vector<10x18x128xf32>
    %14 = arith.addf %10, %13 : vector<10x18x128xf32>
    %cst = arith.constant 0.000000e+00 : f32
    %15 = vector.broadcast %cst : f32 to vector<10x18x128xf32>
    %16 = arith.cmpf ogt, %14, %15 : vector<10x18x128xf32>
    %cst_9 = arith.constant 1.000000e-01 : f32
    %17 = vector.broadcast %cst_9 : f32 to vector<10x18x128xf32>
    %18 = arith.mulf %17, %14 : vector<10x18x128xf32>
    %19 = arith.select %16, %14, %18 : vector<10x18x128xi1>, vector<10x18x128xf32>
    %20 = tpu.iota {dimensions = array<i32: 0>} : vector<10x18x128xi32>
    %c8_i32_10 = arith.constant 8 : i32
    %21 = arith.muli %arg1, %c8_i32_10 : i32
    %22 = vector.broadcast %21 : i32 to vector<10x18x128xi32>
    %23 = arith.addi %20, %22 : vector<10x18x128xi32>
    %24 = tpu.iota {dimensions = array<i32: 1>} : vector<10x18x128xi32>
    %c1_i32 = arith.constant 1 : i32
    %25 = vector.broadcast %c1_i32 : i32 to vector<10x18x128xi32>
    %26 = arith.cmpi sge, %23, %25 : vector<10x18x128xi32>
    %c16_i32 = arith.constant 16 : i32
    %27 = vector.broadcast %c16_i32 : i32 to vector<10x18x128xi32>
    %28 = arith.cmpi sle, %23, %27 : vector<10x18x128xi32>
    %29 = arith.andi %26, %28 : vector<10x18x128xi1>
    %c1_i32_11 = arith.constant 1 : i32
    %30 = vector.broadcast %c1_i32_11 : i32 to vector<10x18x128xi32>
    %31 = arith.cmpi sge, %24, %30 : vector<10x18x128xi32>
    %32 = arith.andi %29, %31 : vector<10x18x128xi1>
    %c16_i32_12 = arith.constant 16 : i32
    %33 = vector.broadcast %c16_i32_12 : i32 to vector<10x18x128xi32>
    %34 = arith.cmpi sle, %24, %33 : vector<10x18x128xi32>
    %35 = arith.andi %32, %34 : vector<10x18x128xi1>
    %cst_13 = arith.constant 0.000000e+00 : f32
    %36 = vector.broadcast %cst_13 : f32 to vector<10x18x128xf32>
    %37 = arith.select %35, %19, %36 : vector<10x18x128xi1>, vector<10x18x128xf32>
    %38 = vector.extract_strided_slice %37 {offsets = [0, 0, 0], sizes = [8, 16, 128], strides = [1, 1, 1]} : vector<10x18x128xf32> to vector<8x16x128xf32>
    %39 = vector.extract_strided_slice %37 {offsets = [0, 1, 0], sizes = [8, 16, 128], strides = [1, 1, 1]} : vector<10x18x128xf32> to vector<8x16x128xf32>
    %40 = vector.extract_strided_slice %37 {offsets = [0, 2, 0], sizes = [8, 16, 128], strides = [1, 1, 1]} : vector<10x18x128xf32> to vector<8x16x128xf32>
    %41 = vector.extract_strided_slice %37 {offsets = [1, 0, 0], sizes = [8, 16, 128], strides = [1, 1, 1]} : vector<10x18x128xf32> to vector<8x16x128xf32>
    %42 = vector.extract_strided_slice %37 {offsets = [1, 1, 0], sizes = [8, 16, 128], strides = [1, 1, 1]} : vector<10x18x128xf32> to vector<8x16x128xf32>
    %43 = vector.extract_strided_slice %37 {offsets = [1, 2, 0], sizes = [8, 16, 128], strides = [1, 1, 1]} : vector<10x18x128xf32> to vector<8x16x128xf32>
    %44 = vector.extract_strided_slice %37 {offsets = [2, 0, 0], sizes = [8, 16, 128], strides = [1, 1, 1]} : vector<10x18x128xf32> to vector<8x16x128xf32>
    %45 = vector.extract_strided_slice %37 {offsets = [2, 1, 0], sizes = [8, 16, 128], strides = [1, 1, 1]} : vector<10x18x128xf32> to vector<8x16x128xf32>
    %46 = vector.extract_strided_slice %37 {offsets = [2, 2, 0], sizes = [8, 16, 128], strides = [1, 1, 1]} : vector<10x18x128xf32> to vector<8x16x128xf32>
    %47 = tpu.concatenate %38, %39, %40, %41, %42, %43, %44, %45, %46 in 2 : vector<8x16x128xf32>, vector<8x16x128xf32>, vector<8x16x128xf32>, vector<8x16x128xf32>, vector<8x16x128xf32>, vector<8x16x128xf32>, vector<8x16x128xf32>, vector<8x16x128xf32>, vector<8x16x128xf32> -> vector<8x16x1152xf32>
    %48 = vector.shape_cast %47 : vector<8x16x1152xf32> to vector<128x1152xf32>
    %c0_14 = arith.constant 0 : index
    %c0_15 = arith.constant 0 : index
    %49 = vector.load %arg5[%c0_14, %c0_15] : memref<1152x128xf32, #tpu.memory_space<vmem>>, vector<1152x128xf32>
    %cst_16 = arith.constant dense<0.000000e+00> : vector<128x128xf32>
    %50 = tpu.matmul %48, %49, %cst_16 {dimension_numbers = #tpu.dot_dimension_numbers<[1], [0], [0], [1], [0, 0, 1, 1], [], []>} : vector<128x1152xf32>, vector<1152x128xf32>, vector<128x128xf32> -> vector<128x128xf32>
    %c0_i32_17 = arith.constant 0 : i32
    %51 = arith.cmpi eq, %arg0, %c0_i32_17 : i32
    %c0_i32_18 = arith.constant 0 : i32
    %52 = arith.cmpi eq, %arg1, %c0_i32_18 : i32
    %53 = arith.andi %51, %52 : i1
    %54 = arith.extui %53 : i1 to i32
    %c0_i32_19 = arith.constant 0 : i32
    %55 = arith.cmpi ne, %54, %c0_i32_19 : i32
    scf.if %55 {
      %cst_30 = arith.constant 0.000000e+00 : f32
      %67 = vector.broadcast %cst_30 : f32 to vector<2x128xf32>
      %c0_31 = arith.constant 0 : index
      %c0_32 = arith.constant 0 : index
      %68 = vector.load %arg7[%c0_31, %c0_32] : memref<2x128xf32, #tpu.memory_space<vmem>>, vector<2x128xf32>
      tpu.vector_store %arg7[%c0_31, %c0_32], %67 {strides = array<i32>} : memref<2x128xf32, #tpu.memory_space<vmem>>, vector<2x128xf32>,
    } else {
    }
    %c0_20 = arith.constant 0 : index
    %c0_21 = arith.constant 0 : index
    %56 = vector.load %arg7[%c0_20, %c0_21] : memref<2x128xf32, #tpu.memory_space<vmem>>, vector<2x128xf32>
    %cst_22 = arith.constant dense<0.000000e+00> : vector<128xf32>
    %57 = vector.multi_reduction <add>, %50, %cst_22 [0] : vector<128x128xf32> to vector<128xf32>
    %58 = vector.shape_cast %57 : vector<128xf32> to vector<1x128xf32>
    %59 = arith.mulf %50, %50 : vector<128x128xf32>
    %cst_23 = arith.constant dense<0.000000e+00> : vector<128xf32>
    %60 = vector.multi_reduction <add>, %59, %cst_23 [0] : vector<128x128xf32> to vector<128xf32>
    %61 = vector.shape_cast %60 : vector<128xf32> to vector<1x128xf32>
    %62 = tpu.concatenate %58, %61 in 0 : vector<1x128xf32>, vector<1x128xf32> -> vector<2x128xf32>
    %63 = arith.addf %56, %62 : vector<2x128xf32>
    %c0_24 = arith.constant 0 : index
    %c0_25 = arith.constant 0 : index
    %64 = vector.load %arg7[%c0_24, %c0_25] : memref<2x128xf32, #tpu.memory_space<vmem>>, vector<2x128xf32>
    tpu.vector_store %arg7[%c0_24, %c0_25], %63 {strides = array<i32>} : memref<2x128xf32, #tpu.memory_space<vmem>>, vector<2x128xf32>,
    %65 = vector.shape_cast %50 : vector<128x128xf32> to vector<1x8x16x128xf32>
    %c0_26 = arith.constant 0 : index
    %c0_27 = arith.constant 0 : index
    %c0_28 = arith.constant 0 : index
    %c0_29 = arith.constant 0 : index
    %66 = vector.load %arg6[%c0_26, %c0_27, %c0_28, %c0_29] : memref<1x8x16x128xf32, #tpu.memory_space<vmem>>, vector<1x8x16x128xf32>
    tpu.vector_store %arg6[%c0_26, %c0_27, %c0_28, %c0_29], %65 {strides = array<i32>} : memref<1x8x16x128xf32, #tpu.memory_space<vmem>>, vector<1x8x16x128xf32>,
    return
  }
  func.func @transform_1(%arg0: i32, %arg1: i32) -> (i32, i32) {
    %c0_i32 = arith.constant 0 : i32
    %c0_i32_0 = arith.constant 0 : i32
    %c0_i32_1 = arith.constant 0 : i32
    return %c0_i32, %c0_i32_0 : i32, i32
  }
  func.func @transform_2(%arg0: i32, %arg1: i32) -> (i32, i32) {
    %c0_i32 = arith.constant 0 : i32
    %c0_i32_0 = arith.constant 0 : i32
    %c0_i32_1 = arith.constant 0 : i32
    return %c0_i32, %c0_i32_0 : i32, i32
  }
  func.func @transform_3(%arg0: i32, %arg1: i32) -> (i32, i32) {
    %c0_i32 = arith.constant 0 : i32
    %c0_i32_0 = arith.constant 0 : i32
    %c0_i32_1 = arith.constant 0 : i32
    return %c0_i32, %c0_i32_0 : i32, i32
  }
  func.func @transform_4(%arg0: i32, %arg1: i32) -> (i32, i32, i32, i32) {
    %c0_i32 = arith.constant 0 : i32
    %c0_i32_0 = arith.constant 0 : i32
    %c0_i32_1 = arith.constant 0 : i32
    return %arg0, %arg1, %c0_i32, %c0_i32_0 : i32, i32, i32, i32
  }
  func.func @transform_5(%arg0: i32, %arg1: i32) -> (i32, i32) {
    %c0_i32 = arith.constant 0 : i32
    %c0_i32_0 = arith.constant 0 : i32
    %c0_i32_1 = arith.constant 0 : i32
    return %c0_i32, %c0_i32_0 : i32, i32
  }
}

</mosaic_0001>

<llo_original>
// kernel: residual_forward.5
$region0: #{residual_forward.5}
  #allocation0 [shape = 'u32[]', space=smem, size = 0x4, offset = 0x4, fixed_abs, tag = 'smem constant byte address 0x4 - core index']
  #allocation1 [shape = 'u32[72,128]{1,0:T(1,128)}', space=vmem, size = 0x9000, scoped, tag = 'internal scratch']
  %s0 = inlined_call_operand.vmem [shape: f32[512,128], index: 0, kind: input, shape index: {}]
  %s1 = inlined_call_operand.vmem [shape: f32[512,128], index: 1, kind: input, shape index: {}]
  %s2 = inlined_call_operand.vmem [shape: f32[1,128], index: 2, kind: input, shape index: {}]
  %s3 = inlined_call_operand.vmem [shape: f32[1,128], index: 3, kind: input, shape index: {}]
  %s4 = inlined_call_operand.vmem [shape: f32[512,128], index: 4, kind: output, shape index: {}]
  %s5 = sld [smem:[#allocation0]]
  $region49: #{residual_forward.5} parent=0
    _
  %s7 = ssub.s32 1, %s5
  %s8 = scalar_select 0, %s7, %s5
  loop: start=0, step=1, limit=6
  $region2: #{residual_forward.5} parent=0 // loop_pre_header
    _
  $region3: #{residual_forward.5} parent=0 // loop_header
    %s10 = sphi 0, %s14
    %p11 = scmp.ge.s32.totalorder %s10, 6
    %s20 = sphi 0, %s22
    %s23 = sphi 0, %s20
    %s24 = sphi 0, %s23
    %s40 = sphi 0, %s24
    %s46 = sphi 0, %s48
    %s49 = sphi 0, %s46
    %s50 = sphi 0, %s49
    %s66 = sphi 0, %s50
    %s70 = sphi 0, %s70
    %s72 = sphi 0, %s70
    %s73 = sphi 0, %s72
    %s87 = sphi 0, %s73
    %s91 = sphi 0, %s91
    %s93 = sphi 0, %s91
    %s94 = sphi 0, %s93
    %s108 = sphi 0, %s94
    %s114 = sphi 0, %s116
    %s117 = sphi 0, %s114
    %s118 = sphi 0, %s117
    %s134 = sphi 0, %s118
  $region4: #{residual_forward.5} parent=0 // loop_header_branch
    %13 = sbr.rel (%p11) target = $region8
  $region5: #{residual_forward.5} parent=0 // loop_body
    %s15 = ssub.s32 %s10, 1
    %s16 = ssub.s32 %s10, 2
    %s17 = sadd.s32 %s10, 1
    %s18 = ssub.s32 %s10, %s17
    %p19 = scmp.eq.s32.totalorder %s18, 0
    %s21 = sadd.s32 %s20, 1
    %s22 = scalar_select %p19, %s20, %s21
    %p25 = pneg %p19
    %p26 = scmp.eq.s32.totalorder %s10, 3
    %p27 = por %p25, %p26
    %p28 = scmp.ne.s32.totalorder %s20, %s23
    %p29 = scmp.eq.s32.totalorder %s10, 0
    %p30 = por %p28, %p29
    %p31 = scmp.ne.s32.totalorder %s20, %s23
    %p32 = scmp.eq.s32.totalorder %s15, 3
    %p33 = por %p31, %p32
    %p34 = scmp.ne.s32.totalorder %s23, %s24
    %p35 = scmp.eq.s32.totalorder %s15, 0
    %p36 = por %p34, %p35
    %p37 = scmp.ne.s32.totalorder %s23, %s24
    %p38 = scmp.eq.s32.totalorder %s16, 3
    %p39 = por %p37, %p38
    %p41 = scmp.ne.s32.totalorder %s24, %s40
    %p42 = scmp.eq.s32.totalorder %s16, 0
    %p43 = por %p41, %p42
    %s44 = ssub.s32 %s10, %s17
    %p45 = scmp.eq.s32.totalorder %s44, 0
    %s47 = sadd.s32 %s46, 1
    %s48 = scalar_select %p45, %s46, %s47
    %p51 = pneg %p45
    %p52 = scmp.eq.s32.totalorder %s10, 3
    %p53 = por %p51, %p52
    %p54 = scmp.ne.s32.totalorder %s46, %s49
    %p55 = scmp.eq.s32.totalorder %s10, 0
    %p56 = por %p54, %p55
    %p57 = scmp.ne.s32.totalorder %s46, %s49
    %p58 = scmp.eq.s32.totalorder %s15, 3
    %p59 = por %p57, %p58
    %p60 = scmp.ne.s32.totalorder %s49, %s50
    %p61 = scmp.eq.s32.totalorder %s15, 0
    %p62 = por %p60, %p61
    %p63 = scmp.ne.s32.totalorder %s49, %s50
    %p64 = scmp.eq.s32.totalorder %s16, 3
    %p65 = por %p63, %p64
    %p67 = scmp.ne.s32.totalorder %s50, %s66
    %p68 = scmp.eq.s32.totalorder %s16, 0
    %p69 = por %p67, %p68
    %s71 = sadd.s32 %s70, 1
    %p74 = scmp.eq.s32.totalorder %s10, 3
    %p75 = scmp.ne.s32.totalorder %s70, %s72
    %p76 = scmp.eq.s32.totalorder %s10, 0
    %p77 = por %p75, %p76
    %p78 = scmp.ne.s32.totalorder %s70, %s72
    %p79 = scmp.eq.s32.totalorder %s15, 3
    %p80 = por %p78, %p79
    %p81 = scmp.ne.s32.totalorder %s72, %s73
    %p82 = scmp.eq.s32.totalorder %s15, 0
    %p83 = por %p81, %p82
    %p84 = scmp.ne.s32.totalorder %s72, %s73
    %p85 = scmp.eq.s32.totalorder %s16, 3
    %p86 = por %p84, %p85
    %p88 = scmp.ne.s32.totalorder %s73, %s87
    %p89 = scmp.eq.s32.totalorder %s16, 0
    %p90 = por %p88, %p89
    %s92 = sadd.s32 %s91, 1
    %p95 = scmp.eq.s32.totalorder %s10, 3
    %p96 = scmp.ne.s32.totalorder %s91, %s93
    %p97 = scmp.eq.s32.totalorder %s10, 0
    %p98 = por %p96, %p97
    %p99 = scmp.ne.s32.totalorder %s91, %s93
    %p100 = scmp.eq.s32.totalorder %s15, 3
    %p101 = por %p99, %p100
    %p102 = scmp.ne.s32.totalorder %s93, %s94
    %p103 = scmp.eq.s32.totalorder %s15, 0
    %p104 = por %p102, %p103
    %p105 = scmp.ne.s32.totalorder %s93, %s94
    %p106 = scmp.eq.s32.totalorder %s16, 3
    %p107 = por %p105, %p106
    %p109 = scmp.ne.s32.totalorder %s94, %s108
    %p110 = scmp.eq.s32.totalorder %s16, 0
    %p111 = por %p109, %p110
    %s112 = ssub.s32 %s10, %s17
    %p113 = scmp.eq.s32.totalorder %s112, 0
    %s115 = sadd.s32 %s114, 1
    %s116 = scalar_select %p113, %s114, %s115
    %p119 = pneg %p113
    %p120 = scmp.eq.s32.totalorder %s10, 3
    %p121 = por %p119, %p120
    %p122 = scmp.ne.s32.totalorder %s114, %s117
    %p123 = scmp.eq.s32.totalorder %s10, 0
    %p124 = por %p122, %p123
    %p125 = scmp.ne.s32.totalorder %s114, %s117
    %p126 = scmp.eq.s32.totalorder %s15, 3
    %p127 = por %p125, %p126
    %p128 = scmp.ne.s32.totalorder %s117, %s118
    %p129 = scmp.eq.s32.totalorder %s15, 0
    %p130 = por %p128, %p129
    %p131 = scmp.ne.s32.totalorder %s117, %s118
    %p132 = scmp.eq.s32.totalorder %s16, 3
    %p133 = por %p131, %p132
    %p135 = scmp.ne.s32.totalorder %s118, %s134
    %p136 = scmp.eq.s32.totalorder %s16, 0
    %p137 = por %p135, %p136
    %p138 = scmp.le.s32.totalorder 1, %s10
    %p139 = scmp.lt.s32.totalorder %s10, 5
    %p140 = pnand %p138, %p139
    %p141 = pneg %p140
    // Predicated region
    $region9: #{residual_forward.5} parent=5 // pred_check
      _
    $region10: #{residual_forward.5} parent=5 // pred_check_branch
      %143 = sbr.rel (%p140) target = $region12
    $region11: #{residual_forward.5} parent=5 // pred_region
      %s144 = ssub.s32 %s10, 1
      // Predicated region
      $region13: #{residual_forward.5} parent=11 // pred_check
        %p145 = pneg %p83
      $region14: #{residual_forward.5} parent=11 // pred_check_branch
        %147 = sbr.rel (%p145) target = $region16
      $region15: #{residual_forward.5} parent=11 // pred_region
        _
      $region16: #{residual_forward.5} parent=11 // pred_fallthru
        _
      // Predicated region
      $region17: #{residual_forward.5} parent=11 // pred_check
        %p148 = pneg %p104
      $region18: #{residual_forward.5} parent=11 // pred_check_branch
        %150 = sbr.rel (%p148) target = $region20
      $region19: #{residual_forward.5} parent=11 // pred_region
        _
      $region20: #{residual_forward.5} parent=11 // pred_fallthru
        _
    $region12: #{residual_forward.5} parent=5 // pred_fallthru
      _
    %p151 = scmp.lt.s32.totalorder %s10, 4
    // Predicated region
    $region21: #{residual_forward.5} parent=5 // pred_check
      %p152 = pneg %p151
    $region22: #{residual_forward.5} parent=5 // pred_check_branch
      %154 = sbr.rel (%p152) target = $region24
    $region23: #{residual_forward.5} parent=5 // pred_region
      // Predicated region
      $region25: #{residual_forward.5} parent=23 // pred_check
        %p155 = pneg %p30
      $region26: #{residual_forward.5} parent=23 // pred_check_branch
        %157 = sbr.rel (%p155) target = $region28
      $region27: #{residual_forward.5} parent=23 // pred_region
        %s158 = smul.u32 16, %s10
        %p159 = scmp.lt.s32.totalorder %s158, 63
        %s160 = scalar_select %p159, %s158, 63
        %s161 = smul.addr %s160, 8
        %s162 = scalar_lea.vmem %s0, %s161
        %s163 = smul.u32 16, %s10
      $region28: #{residual_forward.5} parent=23 // pred_fallthru
        _
      // Predicated region
      $region29: #{residual_forward.5} parent=23 // pred_check
        %p164 = pneg %p56
      $region30: #{residual_forward.5} parent=23 // pred_check_branch
        %166 = sbr.rel (%p164) target = $region32
      $region31: #{residual_forward.5} parent=23 // pred_region
        %s167 = smul.u32 16, %s10
        %p168 = scmp.lt.s32.totalorder %s167, 63
        %s169 = scalar_select %p168, %s167, 63
        %s170 = smul.addr %s169, 8
        %s171 = scalar_lea.vmem %s1, %s170
        %s172 = smul.u32 16, %s10
      $region32: #{residual_forward.5} parent=23 // pred_fallthru
        _
    $region24: #{residual_forward.5} parent=5 // pred_fallthru
      _
    %p173 = scmp.le.s32.totalorder 1, %s10
    %p174 = scmp.lt.s32.totalorder %s10, 5
    %p175 = pnand %p173, %p174
    %p176 = pneg %p175
    // Predicated region
    $region33: #{residual_forward.5} parent=5 // pred_check
      _
    $region34: #{residual_forward.5} parent=5 // pred_check_branch
      %178 = sbr.rel (%p175) target = $region36
    $region35: #{residual_forward.5} parent=5 // pred_region
      %s179 = ssub.s32 %s10, 1
      %s180 = smul.u32 16, %s15
      %p181 = scmp.lt.s32.totalorder %s180, 63
      %s182 = scalar_select %p181, %s180, 63
      %s183 = smul.addr %s182, 8
      %s184 = scalar_lea.vmem %s0, %s183
      %p185 = pneg %p36
      %p186 = pneg %p33
      %s187 = smul.u32 16, %s15
      %p188 = scmp.lt.s32.totalorder %s187, 63
      %s189 = scalar_select %p188, %s187, 63
      %s190 = smul.addr %s189, 8
      %s191 = scalar_lea.vmem %s1, %s190
      %p192 = pneg %p62
      %p193 = pneg %p59
      %p194 = pneg %p83
      %p195 = pneg %p80
      %p196 = pneg %p104
      %p197 = pneg %p101
      %p198 = pneg %p130
      %p199 = pneg %p127
      %s200 = smul.u32 16, %s15
      %p201 = scmp.lt.s32.totalorder %s200, 63
      %s202 = scalar_select %p201, %s200, 63
      %s203 = smul.addr %s202, 8
      %s204 = scalar_lea.vmem %s4, %s203
      %s205 = smul.u32 16, %s15
      %p206 = scmp.lt.s32.totalorder %s205, 63
      %s207 = scalar_select %p206, %s205, 63
      %s208 = smul.addr %s207, 8
      %s209 = scalar_lea.vmem %s0, %s208
      %s210 = smul.u32 16, %s15
      %s211 = smul.u32 16, %s15
      %p212 = scmp.lt.s32.totalorder %s211, 63
      %s213 = scalar_select %p212, %s211, 63
      %s214 = smul.addr %s213, 8
      %s215 = scalar_lea.vmem %s1, %s214
      %s216 = smul.u32 16, %s15
      %s217 = smul.u32 16, %s15
      %p218 = scmp.lt.s32.totalorder %s217, 63
      %s219 = scalar_select %p218, %s217, 63
      %s220 = smul.addr %s219, 8
      %s221 = scalar_lea.vmem %s4, %s220
      %s222 = smul.u32 16, %s15
      %v223 = vld [vmem:[%s209] sm:$0xff]
      %v224 = vld [vmem:[%s209 + $0x8] sm:$0xff]
      %v225 = vld [vmem:[%s209 + $0x10] sm:$0xff]
      %v226 = vld [vmem:[%s209 + $0x18] sm:$0xff]
      %v227 = vld [vmem:[%s209 + $0x20] sm:$0xff]
      %v228 = vld [vmem:[%s209 + $0x28] sm:$0xff]
      %v229 = vld [vmem:[%s209 + $0x30] sm:$0xff]
      %v230 = vld [vmem:[%s209 + $0x38] sm:$0xff]
      %v231 = vld [vmem:[%s209 + $0x40] sm:$0xff]
      %v232 = vld [vmem:[%s209 + $0x48] sm:$0xff]
      %v233 = vld [vmem:[%s209 + $0x50] sm:$0xff]
      %v234 = vld [vmem:[%s209 + $0x58] sm:$0xff]
      %v235 = vld [vmem:[%s209 + $0x60] sm:$0xff]
      %v236 = vld [vmem:[%s209 + $0x68] sm:$0xff]
      %v237 = vld [vmem:[%s209 + $0x70] sm:$0xff]
      %v238 = vld [vmem:[%s209 + $0x78] sm:$0xff]
      %v239 = vld [vmem:[%s2] sm:$0x1]
      %v241 = vperm.slane %v239, 0
      %v243 = vmul.f32 %v223, %v241
      %v244 = vmul.f32 %v224, %v241
      %v245 = vmul.f32 %v225, %v241
      %v246 = vmul.f32 %v226, %v241
      %v247 = vmul.f32 %v227, %v241
      %v248 = vmul.f32 %v228, %v241
      %v249 = vmul.f32 %v229, %v241
      %v250 = vmul.f32 %v230, %v241
      %v251 = vmul.f32 %v231, %v241
      %v252 = vmul.f32 %v232, %v241
      %v253 = vmul.f32 %v233, %v241
      %v254 = vmul.f32 %v234, %v241
      %v255 = vmul.f32 %v235, %v241
      %v256 = vmul.f32 %v236, %v241
      %v257 = vmul.f32 %v237, %v241
      %v258 = vmul.f32 %v238, %v241
      %v259 = vld [vmem:[%s3] sm:$0x1]
      %v261 = vperm.slane %v259, 0
      %v263 = vadd.f32 %v243, %v261
      %v264 = vadd.f32 %v244, %v261
      %v265 = vadd.f32 %v245, %v261
      %v266 = vadd.f32 %v246, %v261
      %v267 = vadd.f32 %v247, %v261
      %v268 = vadd.f32 %v248, %v261
      %v269 = vadd.f32 %v249, %v261
      %v270 = vadd.f32 %v250, %v261
      %v271 = vadd.f32 %v251, %v261
      %v272 = vadd.f32 %v252, %v261
      %v273 = vadd.f32 %v253, %v261
      %v274 = vadd.f32 %v254, %v261
      %v275 = vadd.f32 %v255, %v261
      %v276 = vadd.f32 %v256, %v261
      %v277 = vadd.f32 %v257, %v261
      %v278 = vadd.f32 %v258, %v261
      %v279 = vld [vmem:[%s215] sm:$0xff]
      %v280 = vld [vmem:[%s215 + $0x8] sm:$0xff]
      %v281 = vld [vmem:[%s215 + $0x10] sm:$0xff]
      %v282 = vld [vmem:[%s215 + $0x18] sm:$0xff]
      %v283 = vld [vmem:[%s215 + $0x20] sm:$0xff]
      %v284 = vld [vmem:[%s215 + $0x28] sm:$0xff]
      %v285 = vld [vmem:[%s215 + $0x30] sm:$0xff]
      %v286 = vld [vmem:[%s215 + $0x38] sm:$0xff]
      %v287 = vld [vmem:[%s215 + $0x40] sm:$0xff]
      %v288 = vld [vmem:[%s215 + $0x48] sm:$0xff]
      %v289 = vld [vmem:[%s215 + $0x50] sm:$0xff]
      %v290 = vld [vmem:[%s215 + $0x58] sm:$0xff]
      %v291 = vld [vmem:[%s215 + $0x60] sm:$0xff]
      %v292 = vld [vmem:[%s215 + $0x68] sm:$0xff]
      %v293 = vld [vmem:[%s215 + $0x70] sm:$0xff]
      %v294 = vld [vmem:[%s215 + $0x78] sm:$0xff]
      %vm295 = vcmp.gt.f32.partialorder %v263, 0.0
      %vm296 = vcmp.gt.f32.partialorder %v264, 0.0
      %vm297 = vcmp.gt.f32.partialorder %v265, 0.0
      %vm298 = vcmp.gt.f32.partialorder %v266, 0.0
      %vm299 = vcmp.gt.f32.partialorder %v267, 0.0
      %vm300 = vcmp.gt.f32.partialorder %v268, 0.0
      %vm301 = vcmp.gt.f32.partialorder %v269, 0.0
      %vm302 = vcmp.gt.f32.partialorder %v270, 0.0
      %vm303 = vcmp.gt.f32.partialorder %v271, 0.0
      %vm304 = vcmp.gt.f32.partialorder %v272, 0.0
      %vm305 = vcmp.gt.f32.partialorder %v273, 0.0
      %vm306 = vcmp.gt.f32.partialorder %v274, 0.0
      %vm307 = vcmp.gt.f32.partialorder %v275, 0.0
      %vm308 = vcmp.gt.f32.partialorder %v276, 0.0
      %vm309 = vcmp.gt.f32.partialorder %v277, 0.0
      %vm310 = vcmp.gt.f32.partialorder %v278, 0.0
      %v311 = vmul.f32 %v263, 0.1
      %v312 = vmul.f32 %v264, 0.1
      %v313 = vmul.f32 %v265, 0.1
      %v314 = vmul.f32 %v266, 0.1
      %v315 = vmul.f32 %v267, 0.1
      %v316 = vmul.f32 %v268, 0.1
      %v317 = vmul.f32 %v269, 0.1
      %v318 = vmul.f32 %v270, 0.1
      %v319 = vmul.f32 %v271, 0.1
      %v320 = vmul.f32 %v272, 0.1
      %v321 = vmul.f32 %v273, 0.1
      %v322 = vmul.f32 %v274, 0.1
      %v323 = vmul.f32 %v275, 0.1
      %v324 = vmul.f32 %v276, 0.1
      %v325 = vmul.f32 %v277, 0.1
      %v326 = vmul.f32 %v278, 0.1
      %v327 = vsel %vm295, %v263, %v311
      %v328 = vsel %vm296, %v264, %v312
      %v329 = vsel %vm297, %v265, %v313
      %v330 = vsel %vm298, %v266, %v314
      %v331 = vsel %vm299, %v267, %v315
      %v332 = vsel %vm300, %v268, %v316
      %v333 = vsel %vm301, %v269, %v317
      %v334 = vsel %vm302, %v270, %v318
      %v335 = vsel %vm303, %v271, %v319
      %v336 = vsel %vm304, %v272, %v320
      %v337 = vsel %vm305, %v273, %v321
      %v338 = vsel %vm306, %v274, %v322
      %v339 = vsel %vm307, %v275, %v323
      %v340 = vsel %vm308, %v276, %v324
      %v341 = vsel %vm309, %v277, %v325
      %v342 = vsel %vm310, %v278, %v326
      %v343 = vadd.f32 %v279, %v327
      %v344 = vadd.f32 %v280, %v328
      %v345 = vadd.f32 %v281, %v329
      %v346 = vadd.f32 %v282, %v330
      %v347 = vadd.f32 %v283, %v331
      %v348 = vadd.f32 %v284, %v332
      %v349 = vadd.f32 %v285, %v333
      %v350 = vadd.f32 %v286, %v334
      %v351 = vadd.f32 %v287, %v335
      %v352 = vadd.f32 %v288, %v336
      %v353 = vadd.f32 %v289, %v337
      %v354 = vadd.f32 %v290, %v338
      %v355 = vadd.f32 %v291, %v339
      %v356 = vadd.f32 %v292, %v340
      %v357 = vadd.f32 %v293, %v341
      %v358 = vadd.f32 %v294, %v342
      %359 = vst [vmem:[%s221] sm:$0xff] %v343
      %360 = vst [vmem:[%s221 + $0x8] sm:$0xff] %v344
      %361 = vst [vmem:[%s221 + $0x10] sm:$0xff] %v345
      %362 = vst [vmem:[%s221 + $0x18] sm:$0xff] %v346
      %363 = vst [vmem:[%s221 + $0x20] sm:$0xff] %v347
      %364 = vst [vmem:[%s221 + $0x28] sm:$0xff] %v348
      %365 = vst [vmem:[%s221 + $0x30] sm:$0xff] %v349
      %366 = vst [vmem:[%s221 + $0x38] sm:$0xff] %v350
      %367 = vst [vmem:[%s221 + $0x40] sm:$0xff] %v351
      %368 = vst [vmem:[%s221 + $0x48] sm:$0xff] %v352
      %369 = vst [vmem:[%s221 + $0x50] sm:$0xff] %v353
      %370 = vst [vmem:[%s221 + $0x58] sm:$0xff] %v354
      %371 = vst [vmem:[%s221 + $0x60] sm:$0xff] %v355
      %372 = vst [vmem:[%s221 + $0x68] sm:$0xff] %v356
      %373 = vst [vmem:[%s221 + $0x70] sm:$0xff] %v357
      %374 = vst [vmem:[%s221 + $0x78] sm:$0xff] %v358
      %s375 = smul.u32 16, %s15
      %p376 = scmp.lt.s32.totalorder %s375, 63
      %s377 = scalar_select %p376, %s375, 63
      %s378 = smul.addr %s377, 8
      %s379 = scalar_lea.vmem %s4, %s378
      // Predicated region
      $region37: #{residual_forward.5} parent=35 // pred_check
        %p380 = pneg %p127
      $region38: #{residual_forward.5} parent=35 // pred_check_branch
        %382 = sbr.rel (%p380) target = $region40
      $region39: #{residual_forward.5} parent=35 // pred_region
        %s383 = smul.u32 16, %s15
      $region40: #{residual_forward.5} parent=35 // pred_fallthru
        _
    $region36: #{residual_forward.5} parent=5 // pred_fallthru
      _
    %p384 = scmp.le.s32.totalorder 2, %s10
    // Predicated region
    $region41: #{residual_forward.5} parent=5 // pred_check
      %p385 = pneg %p384
    $region42: #{residual_forward.5} parent=5 // pred_check_branch
      %387 = sbr.rel (%p385) target = $region44
    $region43: #{residual_forward.5} parent=5 // pred_region
      %s388 = ssub.s32 %s10, 2
      // Predicated region
      $region45: #{residual_forward.5} parent=43 // pred_check
        %p389 = pneg %p133
      $region46: #{residual_forward.5} parent=43 // pred_check_branch
        %391 = sbr.rel (%p389) target = $region48
      $region47: #{residual_forward.5} parent=43 // pred_region
        %s392 = smul.u32 16, %s16
        %p393 = scmp.lt.s32.totalorder %s392, 63
        %s394 = scalar_select %p393, %s392, 63
        %s395 = smul.addr %s394, 8
        %s396 = scalar_lea.vmem %s4, %s395
      $region48: #{residual_forward.5} parent=43 // pred_fallthru
        _
    $region44: #{residual_forward.5} parent=5 // pred_fallthru
      _
  $region6: #{residual_forward.5} parent=0 // loop_footer
    %s14 = sadd.s32 1, %s10
  $region7: #{residual_forward.5} parent=0 // loop_footer_branch
    %9 = sbr.rel target = $region3
  $region8: #{residual_forward.5} parent=0 // loop_exit
    _

// kernel: residual_forward.3
$region0: #{residual_forward.3}
  #allocation0 [shape = 'u32[]', space=smem, size = 0x4, offset = 0x4, fixed_abs, tag = 'smem constant byte address 0x4 - core index']
  #allocation1 [shape = 'u32[72,128]{1,0:T(1,128)}', space=vmem, size = 0x9000, scoped, tag = 'internal scratch']
  %s0 = inlined_call_operand.vmem [shape: f32[512,128], index: 0, kind: input, shape index: {}]
  %s1 = inlined_call_operand.vmem [shape: f32[128,128], index: 1, kind: input, shape index: {}]
  %s2 = inlined_call_operand.vmem [shape: f32[512,128], index: 2, kind: output, shape index: {0}]
  %s3 = inlined_call_operand.vmem [shape: f32[2,128], index: 3, kind: output, shape index: {1}]
  %4 = xla_tuple %s2, %s3
  %s5 = sld [smem:[#allocation0]]
  $region53: #{residual_forward.3} parent=0
    _
  %s7 = ssub.s32 1, %s5
  %s8 = scalar_select 0, %s7, %s5
  loop: start=0, step=1, limit=6
  $region2: #{residual_forward.3} parent=0 // loop_pre_header
    _
  $region3: #{residual_forward.3} parent=0 // loop_header
    %s10 = sphi 0, %s14
    %p11 = scmp.ge.s32.totalorder %s10, 6
    %s20 = sphi 0, %s22
    %s23 = sphi 0, %s20
    %s24 = sphi 0, %s23
    %s40 = sphi 0, %s24
    %s44 = sphi 0, %s44
    %s46 = sphi 0, %s44
    %s47 = sphi 0, %s46
    %s61 = sphi 0, %s47
    %s67 = sphi 0, %s69
    %s70 = sphi 0, %s67
    %s71 = sphi 0, %s70
    %s87 = sphi 0, %s71
    %s91 = sphi 0, %s91
    %s93 = sphi 0, %s91
    %s94 = sphi 0, %s93
    %s108 = sphi 0, %s94
  $region4: #{residual_forward.3} parent=0 // loop_header_branch
    %13 = sbr.rel (%p11) target = $region8
  $region5: #{residual_forward.3} parent=0 // loop_body
    %s15 = ssub.s32 %s10, 1
    %s16 = ssub.s32 %s10, 2
    %s17 = sadd.s32 %s10, 1
    %s18 = ssub.s32 %s10, %s17
    %p19 = scmp.eq.s32.totalorder %s18, 0
    %s21 = sadd.s32 %s20, 1
    %s22 = scalar_select %p19, %s20, %s21
    %p25 = pneg %p19
    %p26 = scmp.eq.s32.totalorder %s10, 3
    %p27 = por %p25, %p26
    %p28 = scmp.ne.s32.totalorder %s20, %s23
    %p29 = scmp.eq.s32.totalorder %s10, 0
    %p30 = por %p28, %p29
    %p31 = scmp.ne.s32.totalorder %s20, %s23
    %p32 = scmp.eq.s32.totalorder %s15, 3
    %p33 = por %p31, %p32
    %p34 = scmp.ne.s32.totalorder %s23, %s24
    %p35 = scmp.eq.s32.totalorder %s15, 0
    %p36 = por %p34, %p35
    %p37 = scmp.ne.s32.totalorder %s23, %s24
    %p38 = scmp.eq.s32.totalorder %s16, 3
    %p39 = por %p37, %p38
    %p41 = scmp.ne.s32.totalorder %s24, %s40
    %p42 = scmp.eq.s32.totalorder %s16, 0
    %p43 = por %p41, %p42
    %s45 = sadd.s32 %s44, 1
    %p48 = scmp.eq.s32.totalorder %s10, 3
    %p49 = scmp.ne.s32.totalorder %s44, %s46
    %p50 = scmp.eq.s32.totalorder %s10, 0
    %p51 = por %p49, %p50
    %p52 = scmp.ne.s32.totalorder %s44, %s46
    %p53 = scmp.eq.s32.totalorder %s15, 3
    %p54 = por %p52, %p53
    %p55 = scmp.ne.s32.totalorder %s46, %s47
    %p56 = scmp.eq.s32.totalorder %s15, 0
    %p57 = por %p55, %p56
    %p58 = scmp.ne.s32.totalorder %s46, %s47
    %p59 = scmp.eq.s32.totalorder %s16, 3
    %p60 = por %p58, %p59
    %p62 = scmp.ne.s32.totalorder %s47, %s61
    %p63 = scmp.eq.s32.totalorder %s16, 0
    %p64 = por %p62, %p63
    %s65 = ssub.s32 %s10, %s17
    %p66 = scmp.eq.s32.totalorder %s65, 0
    %s68 = sadd.s32 %s67, 1
    %s69 = scalar_select %p66, %s67, %s68
    %p72 = pneg %p66
    %p73 = scmp.eq.s32.totalorder %s10, 3
    %p74 = por %p72, %p73
    %p75 = scmp.ne.s32.totalorder %s67, %s70
    %p76 = scmp.eq.s32.totalorder %s10, 0
    %p77 = por %p75, %p76
    %p78 = scmp.ne.s32.totalorder %s67, %s70
    %p79 = scmp.eq.s32.totalorder %s15, 3
    %p80 = por %p78, %p79
    %p81 = scmp.ne.s32.totalorder %s70, %s71
    %p82 = scmp.eq.s32.totalorder %s15, 0
    %p83 = por %p81, %p82
    %p84 = scmp.ne.s32.totalorder %s70, %s71
    %p85 = scmp.eq.s32.totalorder %s16, 3
    %p86 = por %p84, %p85
    %p88 = scmp.ne.s32.totalorder %s71, %s87
    %p89 = scmp.eq.s32.totalorder %s16, 0
    %p90 = por %p88, %p89
    %s92 = sadd.s32 %s91, 1
    %p95 = scmp.eq.s32.totalorder %s10, 3
    %p96 = scmp.ne.s32.totalorder %s91, %s93
    %p97 = scmp.eq.s32.totalorder %s10, 0
    %p98 = por %p96, %p97
    %p99 = scmp.ne.s32.totalorder %s91, %s93
    %p100 = scmp.eq.s32.totalorder %s15, 3
    %p101 = por %p99, %p100
    %p102 = scmp.ne.s32.totalorder %s93, %s94
    %p103 = scmp.eq.s32.totalorder %s15, 0
    %p104 = por %p102, %p103
    %p105 = scmp.ne.s32.totalorder %s93, %s94
    %p106 = scmp.eq.s32.totalorder %s16, 3
    %p107 = por %p105, %p106
    %p109 = scmp.ne.s32.totalorder %s94, %s108
    %p110 = scmp.eq.s32.totalorder %s16, 0
    %p111 = por %p109, %p110
    %p112 = scmp.le.s32.totalorder 1, %s10
    %p113 = scmp.lt.s32.totalorder %s10, 5
    %p114 = pnand %p112, %p113
    %p115 = pneg %p114
    // Predicated region
    $region9: #{residual_forward.3} parent=5 // pred_check
      _
    $region10: #{residual_forward.3} parent=5 // pred_check_branch
      %117 = sbr.rel (%p114) target = $region12
    $region11: #{residual_forward.3} parent=5 // pred_region
      %s118 = ssub.s32 %s10, 1
      // Predicated region
      $region13: #{residual_forward.3} parent=11 // pred_check
        %p119 = pneg %p57
      $region14: #{residual_forward.3} parent=11 // pred_check_branch
        %121 = sbr.rel (%p119) target = $region16
      $region15: #{residual_forward.3} parent=11 // pred_region
        _
      $region16: #{residual_forward.3} parent=11 // pred_fallthru
        _
    $region12: #{residual_forward.3} parent=5 // pred_fallthru
      _
    %p122 = scmp.lt.s32.totalorder %s10, 4
    // Predicated region
    $region17: #{residual_forward.3} parent=5 // pred_check
      %p123 = pneg %p122
    $region18: #{residual_forward.3} parent=5 // pred_check_branch
      %125 = sbr.rel (%p123) target = $region20
    $region19: #{residual_forward.3} parent=5 // pred_region
      // Predicated region
      $region21: #{residual_forward.3} parent=19 // pred_check
        %p126 = pneg %p30
      $region22: #{residual_forward.3} parent=19 // pred_check_branch
        %128 = sbr.rel (%p126) target = $region24
      $region23: #{residual_forward.3} parent=19 // pred_region
        %s129 = smul.u32 16, %s10
        %p130 = scmp.lt.s32.totalorder %s129, 63
        %s131 = scalar_select %p130, %s129, 63
        %s132 = smul.addr %s131, 8
        %s133 = scalar_lea.vmem %s0, %s132
        %s134 = smul.u32 16, %s10
      $region24: #{residual_forward.3} parent=19 // pred_fallthru
        _
    $region20: #{residual_forward.3} parent=5 // pred_fallthru
      _
    %p135 = scmp.le.s32.totalorder 1, %s10
    %p136 = scmp.lt.s32.totalorder %s10, 5
    %p137 = pnand %p135, %p136
    %p138 = pneg %p137
    // Predicated region
    $region25: #{residual_forward.3} parent=5 // pred_check
      _
    $region26: #{residual_forward.3} parent=5 // pred_check_branch
      %140 = sbr.rel (%p137) target = $region28
    $region27: #{residual_forward.3} parent=5 // pred_region
      %s141 = ssub.s32 %s10, 1
      %s142 = smul.u32 16, %s15
      %p143 = scmp.lt.s32.totalorder %s142, 63
      %s144 = scalar_select %p143, %s142, 63
      %s145 = smul.addr %s144, 8
      %s146 = scalar_lea.vmem %s0, %s145
      %p147 = pneg %p36
      %p148 = pneg %p33
      %p149 = pneg %p57
      %p150 = pneg %p54
      %p151 = pneg %p83
      %p152 = pneg %p80
      %s153 = smul.u32 16, %s15
      %p154 = scmp.lt.s32.totalorder %s153, 63
      %s155 = scalar_select %p154, %s153, 63
      %s156 = smul.addr %s155, 8
      %s157 = scalar_lea.vmem %s2, %s156
      %p158 = pneg %p104
      %p159 = pneg %p101
      %s160 = smul.u32 16, %s15
      %p161 = scmp.lt.s32.totalorder %s160, 63
      %s162 = scalar_select %p161, %s160, 63
      %s163 = smul.addr %s162, 8
      %s164 = scalar_lea.vmem %s0, %s163
      %s165 = smul.u32 16, %s15
      %s166 = smul.u32 16, %s15
      %p167 = scmp.lt.s32.totalorder %s166, 63
      %s168 = scalar_select %p167, %s166, 63
      %s169 = smul.addr %s168, 8
      %s170 = scalar_lea.vmem %s2, %s169
      %s171 = smul.u32 16, %s15
      %v172 = vld [vmem:[%s164] sm:$0xff]
      %v173 = vld [vmem:[%s164 + $0x8] sm:$0xff]
      %v174 = vld [vmem:[%s164 + $0x10] sm:$0xff]
      %v175 = vld [vmem:[%s164 + $0x18] sm:$0xff]
      %v176 = vld [vmem:[%s164 + $0x20] sm:$0xff]
      %v177 = vld [vmem:[%s164 + $0x28] sm:$0xff]
      %v178 = vld [vmem:[%s164 + $0x30] sm:$0xff]
      %v179 = vld [vmem:[%s164 + $0x38] sm:$0xff]
      %v180 = vld [vmem:[%s164 + $0x40] sm:$0xff]
      %v181 = vld [vmem:[%s164 + $0x48] sm:$0xff]
      %v182 = vld [vmem:[%s164 + $0x50] sm:$0xff]
      %v183 = vld [vmem:[%s164 + $0x58] sm:$0xff]
      %v184 = vld [vmem:[%s164 + $0x60] sm:$0xff]
      %v185 = vld [vmem:[%s164 + $0x68] sm:$0xff]
      %v186 = vld [vmem:[%s164 + $0x70] sm:$0xff]
      %v187 = vld [vmem:[%s164 + $0x78] sm:$0xff]
      %v188 = vld [vmem:[%s1] sm:$0xff]
      %v189 = vld [vmem:[%s1 + $0x8] sm:$0xff]
      %v190 = vld [vmem:[%s1 + $0x10] sm:$0xff]
      %v191 = vld [vmem:[%s1 + $0x18] sm:$0xff]
      %v192 = vld [vmem:[%s1 + $0x20] sm:$0xff]
      %v193 = vld [vmem:[%s1 + $0x28] sm:$0xff]
      %v194 = vld [vmem:[%s1 + $0x30] sm:$0xff]
      %v195 = vld [vmem:[%s1 + $0x38] sm:$0xff]
      %v196 = vld [vmem:[%s1 + $0x40] sm:$0xff]
      %v197 = vld [vmem:[%s1 + $0x48] sm:$0xff]
      %v198 = vld [vmem:[%s1 + $0x50] sm:$0xff]
      %v199 = vld [vmem:[%s1 + $0x58] sm:$0xff]
      %v200 = vld [vmem:[%s1 + $0x60] sm:$0xff]
      %v201 = vld [vmem:[%s1 + $0x68] sm:$0xff]
      %v202 = vld [vmem:[%s1 + $0x70] sm:$0xff]
      %v203 = vld [vmem:[%s1 + $0x78] sm:$0xff]
      %204 = vmatpush.msra.mxu0 %v203
      %205 = vmatpush.msra.mxu0 %v202
      %206 = vmatpush.msra.mxu0 %v201
      %207 = vmatpush.msra.mxu0 %v200
      %208 = vmatpush.msra.mxu0 %v199
      %209 = vmatpush.msra.mxu0 %v198
      %210 = vmatpush.msra.mxu0 %v197
      %211 = vmatpush.msra.mxu0 %v196
      %212 = vmatpush.msra.mxu0 %v195
      %213 = vmatpush.msra.mxu0 %v194
      %214 = vmatpush.msra.mxu0 %v193
      %215 = vmatpush.msra.mxu0 %v192
      %216 = vmatpush.msra.mxu0 %v191
      %217 = vmatpush.msra.mxu0 %v190
      %218 = vmatpush.msra.mxu0 %v189
      %219 = vmatpush.msra.mxu0 %v188
      %220 = vmatmul.f32.gmra.mxu0 %v172
      %v221 = vpop.f32.mrf.mxu0
      %v222 = vadd.f32 0.0, %v221
      %223 = vmatmul.f32.gmra.mxu0 %v173
      %v224 = vpop.f32.mrf.mxu0
      %v225 = vadd.f32 0.0, %v224
      %226 = vmatmul.f32.gmra.mxu0 %v174
      %v227 = vpop.f32.mrf.mxu0
      %v228 = vadd.f32 0.0, %v227
      %229 = vmatmul.f32.gmra.mxu0 %v175
      %v230 = vpop.f32.mrf.mxu0
      %v231 = vadd.f32 0.0, %v230
      %232 = vmatmul.f32.gmra.mxu0 %v176
      %v233 = vpop.f32.mrf.mxu0
      %v234 = vadd.f32 0.0, %v233
      %235 = vmatmul.f32.gmra.mxu0 %v177
      %v236 = vpop.f32.mrf.mxu0
      %v237 = vadd.f32 0.0, %v236
      %238 = vmatmul.f32.gmra.mxu0 %v178
      %v239 = vpop.f32.mrf.mxu0
      %v240 = vadd.f32 0.0, %v239
      %241 = vmatmul.f32.gmra.mxu0 %v179
      %v242 = vpop.f32.mrf.mxu0
      %v243 = vadd.f32 0.0, %v242
      %244 = vmatmul.f32.gmra.mxu0 %v180
      %v245 = vpop.f32.mrf.mxu0
      %v246 = vadd.f32 0.0, %v245
      %247 = vmatmul.f32.gmra.mxu0 %v181
      %v248 = vpop.f32.mrf.mxu0
      %v249 = vadd.f32 0.0, %v248
      %250 = vmatmul.f32.gmra.mxu0 %v182
      %v251 = vpop.f32.mrf.mxu0
      %v252 = vadd.f32 0.0, %v251
      %253 = vmatmul.f32.gmra.mxu0 %v183
      %v254 = vpop.f32.mrf.mxu0
      %v255 = vadd.f32 0.0, %v254
      %256 = vmatmul.f32.gmra.mxu0 %v184
      %v257 = vpop.f32.mrf.mxu0
      %v258 = vadd.f32 0.0, %v257
      %259 = vmatmul.f32.gmra.mxu0 %v185
      %v260 = vpop.f32.mrf.mxu0
      %v261 = vadd.f32 0.0, %v260
      %262 = vmatmul.f32.gmra.mxu0 %v186
      %v263 = vpop.f32.mrf.mxu0
      %v264 = vadd.f32 0.0, %v263
      %265 = vmatmul.f32.gmra.mxu0 %v187
      %v266 = vpop.f32.mrf.mxu0
      %v267 = vadd.f32 0.0, %v266
      %268 = vdwg.mxu0
      %p269 = scmp.eq.s32.totalorder %s15, 0
      // Predicated region
      $region29: #{residual_forward.3} parent=27 // pred_check
        %p270 = pneg %p269
      $region30: #{residual_forward.3} parent=27 // pred_check_branch
        %272 = sbr.rel (%p270) target = $region32
      $region31: #{residual_forward.3} parent=27 // pred_region
        %273 = vst [vmem:[%s3] sm:$0x3] 0.0
      $region32: #{residual_forward.3} parent=27 // pred_fallthru
        _
      %v274 = vld [vmem:[%s3] sm:$0x3]
      %v275 = vadd.f32 %v222, %v225
      %v276 = vadd.f32 %v275, %v228
      %v277 = vadd.f32 %v276, %v231
      %v278 = vadd.f32 %v277, %v234
      %v279 = vadd.f32 %v278, %v237
      %v280 = vadd.f32 %v279, %v240
      %v281 = vadd.f32 %v280, %v243
      %v282 = vadd.f32 %v281, %v246
      %v283 = vadd.f32 %v282, %v249
      %v284 = vadd.f32 %v283, %v252
      %v285 = vadd.f32 %v284, %v255
      %v286 = vadd.f32 %v285, %v258
      %v287 = vadd.f32 %v286, %v261
      %v288 = vadd.f32 %v287, %v264
      %v289 = vadd.f32 %v288, %v267
      %v290 = vrot.slane %v289, 4
      %v291 = vadd.f32 %v289, %v290
      %v292 = vrot.slane %v291, 2
      %v293 = vadd.f32 %v291, %v292
      %v294 = vrot.slane %v293, 1
      %v295 = vadd.f32 %v293, %v294
      %v296 = vmul.f32 %v222, %v222
      %v297 = vmul.f32 %v225, %v225
      %v298 = vmul.f32 %v228, %v228
      %v299 = vmul.f32 %v231, %v231
      %v300 = vmul.f32 %v234, %v234
      %v301 = vmul.f32 %v237, %v237
      %v302 = vmul.f32 %v240, %v240
      %v303 = vmul.f32 %v243, %v243
      %v304 = vmul.f32 %v246, %v246
      %v305 = vmul.f32 %v249, %v249
      %v306 = vmul.f32 %v252, %v252
      %v307 = vmul.f32 %v255, %v255
      %v308 = vmul.f32 %v258, %v258
      %v309 = vmul.f32 %v261, %v261
      %v310 = vmul.f32 %v264, %v264
      %v311 = vmul.f32 %v267, %v267
      %v312 = vadd.f32 %v296, %v297
      %v313 = vadd.f32 %v312, %v298
      %v314 = vadd.f32 %v313, %v299
      %v315 = vadd.f32 %v314, %v300
      %v316 = vadd.f32 %v315, %v301
      %v317 = vadd.f32 %v316, %v302
      %v318 = vadd.f32 %v317, %v303
      %v319 = vadd.f32 %v318, %v304
      %v320 = vadd.f32 %v319, %v305
      %v321 = vadd.f32 %v320, %v306
      %v322 = vadd.f32 %v321, %v307
      %v323 = vadd.f32 %v322, %v308
      %v324 = vadd.f32 %v323, %v309
      %v325 = vadd.f32 %v324, %v310
      %v326 = vadd.f32 %v325, %v311
      %v327 = vrot.slane %v326, 4
      %v328 = vadd.f32 %v326, %v327
      %v329 = vrot.slane %v328, 2
      %v330 = vadd.f32 %v328, %v329
      %v331 = vrot.slane %v330, 1
      %v332 = vadd.f32 %v330, %v331
      %vm333 = vcmask 1040384
      %v334 = vsel %vm333, %v295, %v332
      %v335 = vadd.f32 %v274, %v334
      %336 = vst [vmem:[%s3] sm:$0x3] %v335
      %337 = vst [vmem:[%s170] sm:$0xff] %v222
      %338 = vst [vmem:[%s170 + $0x8] sm:$0xff] %v225
      %339 = vst [vmem:[%s170 + $0x10] sm:$0xff] %v228
      %340 = vst [vmem:[%s170 + $0x18] sm:$0xff] %v231
      %341 = vst [vmem:[%s170 + $0x20] sm:$0xff] %v234
      %342 = vst [vmem:[%s170 + $0x28] sm:$0xff] %v237
      %343 = vst [vmem:[%s170 + $0x30] sm:$0xff] %v240
      %344 = vst [vmem:[%s170 + $0x38] sm:$0xff] %v243
      %345 = vst [vmem:[%s170 + $0x40] sm:$0xff] %v246
      %346 = vst [vmem:[%s170 + $0x48] sm:$0xff] %v249
      %347 = vst [vmem:[%s170 + $0x50] sm:$0xff] %v252
      %348 = vst [vmem:[%s170 + $0x58] sm:$0xff] %v255
      %349 = vst [vmem:[%s170 + $0x60] sm:$0xff] %v258
      %350 = vst [vmem:[%s170 + $0x68] sm:$0xff] %v261
      %351 = vst [vmem:[%s170 + $0x70] sm:$0xff] %v264
      %352 = vst [vmem:[%s170 + $0x78] sm:$0xff] %v267
      %s353 = smul.u32 16, %s15
      %p354 = scmp.lt.s32.totalorder %s353, 63
      %s355 = scalar_select %p354, %s353, 63
      %s356 = smul.addr %s355, 8
      %s357 = scalar_lea.vmem %s2, %s356
      // Predicated region
      $region33: #{residual_forward.3} parent=27 // pred_check
        %p358 = pneg %p80
      $region34: #{residual_forward.3} parent=27 // pred_check_branch
        %360 = sbr.rel (%p358) target = $region36
      $region35: #{residual_forward.3} parent=27 // pred_region
        %s361 = smul.u32 16, %s15
      $region36: #{residual_forward.3} parent=27 // pred_fallthru
        _
      // Predicated region
      $region37: #{residual_forward.3} parent=27 // pred_check
        %p362 = pneg %p101
      $region38: #{residual_forward.3} parent=27 // pred_check_branch
        %364 = sbr.rel (%p362) target = $region40
      $region39: #{residual_forward.3} parent=27 // pred_region
        _
      $region40: #{residual_forward.3} parent=27 // pred_fallthru
        _
      // Predicated region
      $region41: #{residual_forward.3} parent=27 // pred_check
        %p365 = pneg %p101
      $region42: #{residual_forward.3} parent=27 // pred_check_branch
        %367 = sbr.rel (%p365) target = $region44
      $region43: #{residual_forward.3} parent=27 // pred_region
        _
      $region44: #{residual_forward.3} parent=27 // pred_fallthru
        _
    $region28: #{residual_forward.3} parent=5 // pred_fallthru
      _
    %p368 = scmp.le.s32.totalorder 2, %s10
    // Predicated region
    $region45: #{residual_forward.3} parent=5 // pred_check
      %p369 = pneg %p368
    $region46: #{residual_forward.3} parent=5 // pred_check_branch
      %371 = sbr.rel (%p369) target = $region48
    $region47: #{residual_forward.3} parent=5 // pred_region
      %s372 = ssub.s32 %s10, 2
      // Predicated region
      $region49: #{residual_forward.3} parent=47 // pred_check
        %p373 = pneg %p86
      $region50: #{residual_forward.3} parent=47 // pred_check_branch
        %375 = sbr.rel (%p373) target = $region52
      $region51: #{residual_forward.3} parent=47 // pred_region
        %s376 = smul.u32 16, %s16
        %p377 = scmp.lt.s32.totalorder %s376, 63
        %s378 = scalar_select %p377, %s376, 63
        %s379 = smul.addr %s378, 8
        %s380 = scalar_lea.vmem %s2, %s379
      $region52: #{residual_forward.3} parent=47 // pred_fallthru
        _
    $region48: #{residual_forward.3} parent=5 // pred_fallthru
      _
  $region6: #{residual_forward.3} parent=0 // loop_footer
    %s14 = sadd.s32 1, %s10
  $region7: #{residual_forward.3} parent=0 // loop_footer_branch
    %9 = sbr.rel target = $region3
  $region8: #{residual_forward.3} parent=0 // loop_exit
    _

// kernel: residual_forward.4
$region0: #{residual_forward.4}
  #allocation0 [shape = 'u32[]', space=smem, size = 0x4, offset = 0x4, fixed_abs, tag = 'smem constant byte address 0x4 - core index']
  #allocation1 [shape = 'u32[72,128]{1,0:T(1,128)}', space=vmem, size = 0x9000, scoped, tag = 'internal scratch']
  #allocation2 [shape = 'f32[10,18,128]{2,1,0:T(8,128)}', space=vmem, size = 0x1e000, scoped, tag = 'scratch operand']
  #allocation3 [shape = 's32[1]{0}', space=sflag, size = 0x4, scoped, tag = 'scratch operand']
  #allocation4 [shape = 's32[]', space=sflag, size = 0x4, offset = 0, fixed_abs, tag = 'sflag constant byte address 0x0 - dummy sync flag']
  %s0 = inlined_call_operand.vmem [shape: f32[2,18,18,128], index: 0, kind: input, shape index: {}]
  %s1 = inlined_call_operand.vmem [shape: f32[1,128], index: 1, kind: input, shape index: {}]
  %s2 = inlined_call_operand.vmem [shape: f32[1,128], index: 2, kind: input, shape index: {}]
  %s3 = inlined_call_operand.vmem [shape: f32[1152,128], index: 3, kind: input, shape index: {}]
  %s4 = inlined_call_operand.vmem [shape: f32[2,16,16,128], index: 4, kind: output, shape index: {0}]
  %s5 = inlined_call_operand.vmem [shape: f32[2,128], index: 5, kind: output, shape index: {1}]
  %6 = xla_tuple %s4, %s5
  %s7 = sld [smem:[#allocation0]]
  $region79: #{residual_forward.4} parent=0
    _
  %s9 = ssub.s32 1, %s7
  %s10 = scalar_select 0, %s9, %s7
  loop: start=0, step=1, limit=6
  $region2: #{residual_forward.4} parent=0 // loop_pre_header
    _
  $region3: #{residual_forward.4} parent=0 // loop_header
    %s12 = sphi 0, %s16
    %p13 = scmp.ge.s32.totalorder %s12, 6
    %s19 = sphi 0, %s31
    %s20 = sphi 0, %s27
    %s21 = sphi 0, %s19
    %s22 = sphi 0, %s20
    %s23 = sphi 0, %s21
    %s24 = sphi 0, %s22
    %s32 = sphi 0, %s32
    %s34 = sphi 0, %s32
    %s35 = sphi 0, %s34
    %s49 = sphi 0, %s35
    %s53 = sphi 0, %s53
    %s55 = sphi 0, %s53
    %s56 = sphi 0, %s55
    %s70 = sphi 0, %s56
    %s74 = sphi 0, %s74
    %s76 = sphi 0, %s74
    %s77 = sphi 0, %s76
    %s91 = sphi 0, %s77
    %s99 = sphi 0, %s101
    %s102 = sphi 0, %s99
    %s103 = sphi 0, %s102
    %s119 = sphi 0, %s103
    %s123 = sphi 0, %s123
    %s125 = sphi 0, %s123
    %s126 = sphi 0, %s125
    %s140 = sphi 0, %s126
  $region4: #{residual_forward.4} parent=0 // loop_header_branch
    %15 = sbr.rel (%p13) target = $region8
  $region5: #{residual_forward.4} parent=0 // loop_body
    %s17 = ssub.s32 %s12, 1
    %s18 = ssub.s32 %s12, 2
    %s25 = sadd.s32 1, %s20
    %p26 = scmp.ge.s32.totalorder %s25, 2
    %s27 = scalar_select %p26, 0, %s25
    %s28 = sadd.s32 1, %s19
    %s29 = scalar_select %p26, %s28, %s19
    %p30 = scmp.ge.s32.totalorder %s29, 2
    %s31 = scalar_select %p30, 0, %s29
    %s33 = sadd.s32 %s32, 1
    %p36 = scmp.eq.s32.totalorder %s12, 3
    %p37 = scmp.ne.s32.totalorder %s32, %s34
    %p38 = scmp.eq.s32.totalorder %s12, 0
    %p39 = por %p37, %p38
    %p40 = scmp.ne.s32.totalorder %s32, %s34
    %p41 = scmp.eq.s32.totalorder %s17, 3
    %p42 = por %p40, %p41
    %p43 = scmp.ne.s32.totalorder %s34, %s35
    %p44 = scmp.eq.s32.totalorder %s17, 0
    %p45 = por %p43, %p44
    %p46 = scmp.ne.s32.totalorder %s34, %s35
    %p47 = scmp.eq.s32.totalorder %s18, 3
    %p48 = por %p46, %p47
    %p50 = scmp.ne.s32.totalorder %s35, %s49
    %p51 = scmp.eq.s32.totalorder %s18, 0
    %p52 = por %p50, %p51
    %s54 = sadd.s32 %s53, 1
    %p57 = scmp.eq.s32.totalorder %s12, 3
    %p58 = scmp.ne.s32.totalorder %s53, %s55
    %p59 = scmp.eq.s32.totalorder %s12, 0
    %p60 = por %p58, %p59
    %p61 = scmp.ne.s32.totalorder %s53, %s55
    %p62 = scmp.eq.s32.totalorder %s17, 3
    %p63 = por %p61, %p62
    %p64 = scmp.ne.s32.totalorder %s55, %s56
    %p65 = scmp.eq.s32.totalorder %s17, 0
    %p66 = por %p64, %p65
    %p67 = scmp.ne.s32.totalorder %s55, %s56
    %p68 = scmp.eq.s32.totalorder %s18, 3
    %p69 = por %p67, %p68
    %p71 = scmp.ne.s32.totalorder %s56, %s70
    %p72 = scmp.eq.s32.totalorder %s18, 0
    %p73 = por %p71, %p72
    %s75 = sadd.s32 %s74, 1
    %p78 = scmp.eq.s32.totalorder %s12, 3
    %p79 = scmp.ne.s32.totalorder %s74, %s76
    %p80 = scmp.eq.s32.totalorder %s12, 0
    %p81 = por %p79, %p80
    %p82 = scmp.ne.s32.totalorder %s74, %s76
    %p83 = scmp.eq.s32.totalorder %s17, 3
    %p84 = por %p82, %p83
    %p85 = scmp.ne.s32.totalorder %s76, %s77
    %p86 = scmp.eq.s32.totalorder %s17, 0
    %p87 = por %p85, %p86
    %p88 = scmp.ne.s32.totalorder %s76, %s77
    %p89 = scmp.eq.s32.totalorder %s18, 3
    %p90 = por %p88, %p89
    %p92 = scmp.ne.s32.totalorder %s77, %s91
    %p93 = scmp.eq.s32.totalorder %s18, 0
    %p94 = por %p92, %p93
    %s95 = ssub.s32 %s19, %s31
    %s96 = ssub.s32 %s20, %s27
    %s97 = sor.u32 %s95, %s96
    %p98 = scmp.eq.s32.totalorder %s97, 0
    %s100 = sadd.s32 %s99, 1
    %s101 = scalar_select %p98, %s99, %s100
    %p104 = pneg %p98
    %p105 = scmp.eq.s32.totalorder %s12, 3
    %p106 = por %p104, %p105
    %p107 = scmp.ne.s32.totalorder %s99, %s102
    %p108 = scmp.eq.s32.totalorder %s12, 0
    %p109 = por %p107, %p108
    %p110 = scmp.ne.s32.totalorder %s99, %s102
    %p111 = scmp.eq.s32.totalorder %s17, 3
    %p112 = por %p110, %p111
    %p113 = scmp.ne.s32.totalorder %s102, %s103
    %p114 = scmp.eq.s32.totalorder %s17, 0
    %p115 = por %p113, %p114
    %p116 = scmp.ne.s32.totalorder %s102, %s103
    %p117 = scmp.eq.s32.totalorder %s18, 3
    %p118 = por %p116, %p117
    %p120 = scmp.ne.s32.totalorder %s103, %s119
    %p121 = scmp.eq.s32.totalorder %s18, 0
    %p122 = por %p120, %p121
    %s124 = sadd.s32 %s123, 1
    %p127 = scmp.eq.s32.totalorder %s12, 3
    %p128 = scmp.ne.s32.totalorder %s123, %s125
    %p129 = scmp.eq.s32.totalorder %s12, 0
    %p130 = por %p128, %p129
    %p131 = scmp.ne.s32.totalorder %s123, %s125
    %p132 = scmp.eq.s32.totalorder %s17, 3
    %p133 = por %p131, %p132
    %p134 = scmp.ne.s32.totalorder %s125, %s126
    %p135 = scmp.eq.s32.totalorder %s17, 0
    %p136 = por %p134, %p135
    %p137 = scmp.ne.s32.totalorder %s125, %s126
    %p138 = scmp.eq.s32.totalorder %s18, 3
    %p139 = por %p137, %p138
    %p141 = scmp.ne.s32.totalorder %s126, %s140
    %p142 = scmp.eq.s32.totalorder %s18, 0
    %p143 = por %p141, %p142
    %p144 = scmp.le.s32.totalorder 1, %s12
    %p145 = scmp.lt.s32.totalorder %s12, 5
    %p146 = pnand %p144, %p145
    %p147 = pneg %p146
    // Predicated region
    $region9: #{residual_forward.4} parent=5 // pred_check
      _
    $region10: #{residual_forward.4} parent=5 // pred_check_branch
      %149 = sbr.rel (%p146) target = $region12
    $region11: #{residual_forward.4} parent=5 // pred_region
      %s150 = ssub.s32 %s12, 1
      // Predicated region
      $region13: #{residual_forward.4} parent=11 // pred_check
        %p151 = pneg %p45
      $region14: #{residual_forward.4} parent=11 // pred_check_branch
        %153 = sbr.rel (%p151) target = $region16
      $region15: #{residual_forward.4} parent=11 // pred_region
        _
      $region16: #{residual_forward.4} parent=11 // pred_fallthru
        _
      // Predicated region
      $region17: #{residual_forward.4} parent=11 // pred_check
        %p154 = pneg %p66
      $region18: #{residual_forward.4} parent=11 // pred_check_branch
        %156 = sbr.rel (%p154) target = $region20
      $region19: #{residual_forward.4} parent=11 // pred_region
        _
      $region20: #{residual_forward.4} parent=11 // pred_fallthru
        _
      // Predicated region
      $region21: #{residual_forward.4} parent=11 // pred_check
        %p157 = pneg %p87
      $region22: #{residual_forward.4} parent=11 // pred_check_branch
        %159 = sbr.rel (%p157) target = $region24
      $region23: #{residual_forward.4} parent=11 // pred_region
        _
      $region24: #{residual_forward.4} parent=11 // pred_fallthru
        _
    $region12: #{residual_forward.4} parent=5 // pred_fallthru
      _
    %p160 = scmp.lt.s32.totalorder %s12, 4
    // Predicated region
    $region25: #{residual_forward.4} parent=5 // pred_check
      %p161 = pneg %p160
    $region26: #{residual_forward.4} parent=5 // pred_check_branch
      %163 = sbr.rel (%p161) target = $region28
    $region27: #{residual_forward.4} parent=5 // pred_region
      _
    $region28: #{residual_forward.4} parent=5 // pred_fallthru
      _
    %p164 = scmp.le.s32.totalorder 1, %s12
    %p165 = scmp.lt.s32.totalorder %s12, 5
    %p166 = pnand %p164, %p165
    %p167 = pneg %p166
    // Predicated region
    $region29: #{residual_forward.4} parent=5 // pred_check
      _
    $region30: #{residual_forward.4} parent=5 // pred_check_branch
      %169 = sbr.rel (%p166) target = $region32
    $region31: #{residual_forward.4} parent=5 // pred_region
      %s170 = ssub.s32 %s12, 1
      %p171 = pneg %p45
      %p172 = pneg %p42
      %p173 = pneg %p66
      %p174 = pneg %p63
      %p175 = pneg %p87
      %p176 = pneg %p84
      %p177 = pneg %p115
      %p178 = pneg %p112
      %s179 = smul.u32 8, %s22
      %p180 = scmp.lt.s32.totalorder %s21, 1
      %s181 = scalar_select %p180, %s21, 1
      %p182 = scmp.lt.s32.totalorder %s179, 15
      %s183 = scalar_select %p182, %s179, 15
      %s184 = smul.addr %s183, 2
      %s185 = smul.addr %s181, 32
      %s186 = sadd.s32 %s184, %s185
      %s187 = smul.addr %s186, 8
      %s188 = scalar_lea.vmem %s4, %s187
      %p189 = pneg %p136
      %p190 = pneg %p133
      %s191 = smul.u32 8, %s22
      %p192 = scmp.lt.s32.totalorder %s21, 1
      %s193 = scalar_select %p192, %s21, 1
      %p194 = scmp.lt.s32.totalorder %s191, 15
      %s195 = scalar_select %p194, %s191, 15
      %s196 = smul.addr %s195, 2
      %s197 = smul.addr %s193, 32
      %s198 = sadd.s32 %s196, %s197
      %s199 = smul.addr %s198, 8
      %s200 = scalar_lea.vmem %s4, %s199
      %s201 = smul.u32 8, %s22
      %s202 = smul.u32 %s22, 8
      %s203 = smul.u32 %s202, 24
      %s204 = smul.u32 %s21, 432
      %s205 = sadd.s32 %s203, %s204
      %s206 = scalar_lea.vmem %s0, %s205
      // Predicated region
      $region33: #{residual_forward.4} parent=31 // pred_check
        _
      $region34: #{residual_forward.4} parent=31 // pred_check_branch
        %208 = sbr.rel (0) target = $region36
      $region35: #{residual_forward.4} parent=31 // pred_region
        %s209 = scalar_lea.vmem %s206, 16
        %s210 = scalar_lea.vmem [#allocation2], 16
        loop: start=0, step=1, limit=1
        $region37: #{residual_forward.4} parent=35 // loop_pre_header
          _
        $region38: #{residual_forward.4} parent=35 // loop_header
          %s212 = sphi 0, %s216
          %p213 = scmp.ge.s32.totalorder %s212, 1
          %s217 = sphi %s206, %s206
          %s218 = sphi [#allocation2], [#allocation2]
        $region39: #{residual_forward.4} parent=35 // loop_header_branch
          %215 = sbr.rel (%p213) target = $region43
        $region40: #{residual_forward.4} parent=35 // loop_body
          %v219 = vld [vmem:[%s217] sm:$0xff]
          %220 = vst [vmem:[%s218] sm:$0xff] %v219
          %v221 = vld [vmem:[%s217 + $0x8] sm:$0xff]
          %222 = vst [vmem:[%s218 + $0x8] sm:$0xff] %v221
          %v223 = vld [vmem:[%s217 + $0x18] sm:$0xff]
          %224 = vst [vmem:[%s218 + $0x18] sm:$0xff] %v223
          %v225 = vld [vmem:[%s217 + $0x20] sm:$0xff]
          %226 = vst [vmem:[%s218 + $0x20] sm:$0xff] %v225
          %v227 = vld [vmem:[%s217 + $0x30] sm:$0xff]
          %228 = vst [vmem:[%s218 + $0x30] sm:$0xff] %v227
          %v229 = vld [vmem:[%s217 + $0x38] sm:$0xff]
          %230 = vst [vmem:[%s218 + $0x38] sm:$0xff] %v229
          %v231 = vld [vmem:[%s217 + $0x48] sm:$0xff]
          %232 = vst [vmem:[%s218 + $0x48] sm:$0xff] %v231
          %v233 = vld [vmem:[%s217 + $0x50] sm:$0xff]
          %234 = vst [vmem:[%s218 + $0x50] sm:$0xff] %v233
          %v235 = vld [vmem:[%s217 + $0x60] sm:$0xff]
          %236 = vst [vmem:[%s218 + $0x60] sm:$0xff] %v235
          %v237 = vld [vmem:[%s217 + $0x68] sm:$0xff]
          %238 = vst [vmem:[%s218 + $0x68] sm:$0xff] %v237
          %v239 = vld [vmem:[%s217 + $0x78] sm:$0xff]
          %240 = vst [vmem:[%s218 + $0x78] sm:$0xff] %v239
          %v241 = vld [vmem:[%s217 + $0x80] sm:$0xff]
          %242 = vst [vmem:[%s218 + $0x80] sm:$0xff] %v241
          %v243 = vld [vmem:[%s217 + $0x90] sm:$0xff]
          %244 = vst [vmem:[%s218 + $0x90] sm:$0xff] %v243
          %v245 = vld [vmem:[%s217 + $0x98] sm:$0xff]
          %246 = vst [vmem:[%s218 + $0x98] sm:$0xff] %v245
          %v247 = vld [vmem:[%s217 + $0xa8] sm:$0xff]
          %248 = vst [vmem:[%s218 + $0xa8] sm:$0xff] %v247
          %v249 = vld [vmem:[%s217 + $0xb0] sm:$0xff]
          %250 = vst [vmem:[%s218 + $0xb0] sm:$0xff] %v249
          %v251 = vld [vmem:[%s217 + $0xc0] sm:$0xff]
          %252 = vst [vmem:[%s218 + $0xc0] sm:$0xff] %v251
          %v253 = vld [vmem:[%s217 + $0xc8] sm:$0xff]
          %254 = vst [vmem:[%s218 + $0xc8] sm:$0xff] %v253
          %v255 = vld [vmem:[%s217 + $0xd8] sm:$0xff]
          %256 = vst [vmem:[%s218 + $0xd8] sm:$0xff] %v255
          %v257 = vld [vmem:[%s217 + $0xe0] sm:$0xff]
          %258 = vst [vmem:[%s218 + $0xe0] sm:$0xff] %v257
        $region41: #{residual_forward.4} parent=35 // loop_footer
          %s216 = sadd.s32 1, %s212
        $region42: #{residual_forward.4} parent=35 // loop_footer_branch
          %211 = sbr.rel target = $region38
        $region43: #{residual_forward.4} parent=35 // loop_exit
          _
        %s260 = ssub.s32 4, 1
        loop: start=0, step=1, limit=1
        $region44: #{residual_forward.4} parent=35 // loop_pre_header
          _
        $region45: #{residual_forward.4} parent=35 // loop_header
          %s262 = sphi 0, %s266
          %p263 = scmp.ge.s32.totalorder %s262, 1
          %s267 = sphi %s209, %s209
          %s268 = sphi %s210, %s210
        $region46: #{residual_forward.4} parent=35 // loop_header_branch
          %265 = sbr.rel (%p263) target = $region50
        $region47: #{residual_forward.4} parent=35 // loop_body
          %v269 = vld [vmem:[%s267] sm:%s260]
          %270 = vst [vmem:[%s268] sm:%s260] %v269
          %v271 = vld [vmem:[%s267 + $0x18] sm:%s260]
          %272 = vst [vmem:[%s268 + $0x18] sm:%s260] %v271
          %v273 = vld [vmem:[%s267 + $0x30] sm:%s260]
          %274 = vst [vmem:[%s268 + $0x30] sm:%s260] %v273
          %v275 = vld [vmem:[%s267 + $0x48] sm:%s260]
          %276 = vst [vmem:[%s268 + $0x48] sm:%s260] %v275
          %v277 = vld [vmem:[%s267 + $0x60] sm:%s260]
          %278 = vst [vmem:[%s268 + $0x60] sm:%s260] %v277
          %v279 = vld [vmem:[%s267 + $0x78] sm:%s260]
          %280 = vst [vmem:[%s268 + $0x78] sm:%s260] %v279
          %v281 = vld [vmem:[%s267 + $0x90] sm:%s260]
          %282 = vst [vmem:[%s268 + $0x90] sm:%s260] %v281
          %v283 = vld [vmem:[%s267 + $0xa8] sm:%s260]
          %284 = vst [vmem:[%s268 + $0xa8] sm:%s260] %v283
          %v285 = vld [vmem:[%s267 + $0xc0] sm:%s260]
          %286 = vst [vmem:[%s268 + $0xc0] sm:%s260] %v285
          %v287 = vld [vmem:[%s267 + $0xd8] sm:%s260]
          %288 = vst [vmem:[%s268 + $0xd8] sm:%s260] %v287
        $region48: #{residual_forward.4} parent=35 // loop_footer
          %s266 = sadd.s32 1, %s262
        $region49: #{residual_forward.4} parent=35 // loop_footer_branch
          %261 = sbr.rel target = $region45
        $region50: #{residual_forward.4} parent=35 // loop_exit
          _
      $region36: #{residual_forward.4} parent=31 // pred_fallthru
        _
      // Predicated region
      $region51: #{residual_forward.4} parent=31 // pred_check
        _
      $region52: #{residual_forward.4} parent=31 // pred_check_branch
        %291 = sbr.rel (0) target = $region54
      $region53: #{residual_forward.4} parent=31 // pred_region
        %292 = vsyncadd [#allocation3], 2880
      $region54: #{residual_forward.4} parent=31 // pred_fallthru
        _
      %s293 = smul.u32 10, 18
      %s294 = smul.u32 %s293, 1
      %s295 = sshll.u32 %s294, 4
      %296 = dma.done [#allocation3], %s295
      %v297 = vld [vmem:[#allocation2] sm:$0xff]
      %v298 = vld [vmem:[#allocation2 + $0x8] sm:$0xff]
      %v299 = vld [vmem:[#allocation2 + $0x10] sm:$0x3]
      %v300 = vld [vmem:[#allocation2 + $0x18] sm:$0xff]
      %v301 = vld [vmem:[#allocation2 + $0x20] sm:$0xff]
      %v302 = vld [vmem:[#allocation2 + $0x28] sm:$0x3]
      %v303 = vld [vmem:[#allocation2 + $0x30] sm:$0xff]
      %v304 = vld [vmem:[#allocation2 + $0x38] sm:$0xff]
      %v305 = vld [vmem:[#allocation2 + $0x40] sm:$0x3]
      %v306 = vld [vmem:[#allocation2 + $0x48] sm:$0xff]
      %v307 = vld [vmem:[#allocation2 + $0x50] sm:$0xff]
      %v308 = vld [vmem:[#allocation2 + $0x58] sm:$0x3]
      %v309 = vld [vmem:[#allocation2 + $0x60] sm:$0xff]
      %v310 = vld [vmem:[#allocation2 + $0x68] sm:$0xff]
      %v311 = vld [vmem:[#allocation2 + $0x70] sm:$0x3]
      %v312 = vld [vmem:[#allocation2 + $0x78] sm:$0xff]
      %v313 = vld [vmem:[#allocation2 + $0x80] sm:$0xff]
      %v314 = vld [vmem:[#allocation2 + $0x88] sm:$0x3]
      %v315 = vld [vmem:[#allocation2 + $0x90] sm:$0xff]
      %v316 = vld [vmem:[#allocation2 + $0x98] sm:$0xff]
      %v317 = vld [vmem:[#allocation2 + $0xa0] sm:$0x3]
      %v318 = vld [vmem:[#allocation2 + $0xa8] sm:$0xff]
      %v319 = vld [vmem:[#allocation2 + $0xb0] sm:$0xff]
      %v320 = vld [vmem:[#allocation2 + $0xb8] sm:$0x3]
      %v321 = vld [vmem:[#allocation2 + $0xc0] sm:$0xff]
      %v322 = vld [vmem:[#allocation2 + $0xc8] sm:$0xff]
      %v323 = vld [vmem:[#allocation2 + $0xd0] sm:$0x3]
      %v324 = vld [vmem:[#allocation2 + $0xd8] sm:$0xff]
      %v325 = vld [vmem:[#allocation2 + $0xe0] sm:$0xff]
      %v326 = vld [vmem:[#allocation2 + $0xe8] sm:$0x3]
      %v327 = vld [vmem:[%s1] sm:$0x1]
      %v329 = vperm.slane %v327, 0
      %v331 = vmul.f32 %v297, %v329
      %v332 = vmul.f32 %v298, %v329
      %v333 = vmul.f32 %v299, %v329
      %v334 = vmul.f32 %v300, %v329
      %v335 = vmul.f32 %v301, %v329
      %v336 = vmul.f32 %v302, %v329
      %v337 = vmul.f32 %v303, %v329
      %v338 = vmul.f32 %v304, %v329
      %v339 = vmul.f32 %v305, %v329
      %v340 = vmul.f32 %v306, %v329
      %v341 = vmul.f32 %v307, %v329
      %v342 = vmul.f32 %v308, %v329
      %v343 = vmul.f32 %v309, %v329
      %v344 = vmul.f32 %v310, %v329
      %v345 = vmul.f32 %v311, %v329
      %v346 = vmul.f32 %v312, %v329
      %v347 = vmul.f32 %v313, %v329
      %v348 = vmul.f32 %v314, %v329
      %v349 = vmul.f32 %v315, %v329
      %v350 = vmul.f32 %v316, %v329
      %v351 = vmul.f32 %v317, %v329
      %v352 = vmul.f32 %v318, %v329
      %v353 = vmul.f32 %v319, %v329
      %v354 = vmul.f32 %v320, %v329
      %v355 = vmul.f32 %v321, %v329
      %v356 = vmul.f32 %v322, %v329
      %v357 = vmul.f32 %v323, %v329
      %v358 = vmul.f32 %v324, %v329
      %v359 = vmul.f32 %v325, %v329
      %v360 = vmul.f32 %v326, %v329
      %v361 = vld [vmem:[%s2] sm:$0x1]
      %v363 = vperm.slane %v361, 0
      %v365 = vadd.f32 %v331, %v363
      %v366 = vadd.f32 %v332, %v363
      %v367 = vadd.f32 %v333, %v363
      %v368 = vadd.f32 %v334, %v363
      %v369 = vadd.f32 %v335, %v363
      %v370 = vadd.f32 %v336, %v363
      %v371 = vadd.f32 %v337, %v363
      %v372 = vadd.f32 %v338, %v363
      %v373 = vadd.f32 %v339, %v363
      %v374 = vadd.f32 %v340, %v363
      %v375 = vadd.f32 %v341, %v363
      %v376 = vadd.f32 %v342, %v363
      %v377 = vadd.f32 %v343, %v363
      %v378 = vadd.f32 %v344, %v363
      %v379 = vadd.f32 %v345, %v363
      %v380 = vadd.f32 %v346, %v363
      %v381 = vadd.f32 %v347, %v363
      %v382 = vadd.f32 %v348, %v363
      %v383 = vadd.f32 %v349, %v363
      %v384 = vadd.f32 %v350, %v363
      %v385 = vadd.f32 %v351, %v363
      %v386 = vadd.f32 %v352, %v363
      %v387 = vadd.f32 %v353, %v363
      %v388 = vadd.f32 %v354, %v363
      %v389 = vadd.f32 %v355, %v363
      %v390 = vadd.f32 %v356, %v363
      %v391 = vadd.f32 %v357, %v363
      %v392 = vadd.f32 %v358, %v363
      %v393 = vadd.f32 %v359, %v363
      %v394 = vadd.f32 %v360, %v363
      %vm395 = vcmp.gt.f32.partialorder %v365, 0.0
      %vm396 = vcmp.gt.f32.partialorder %v366, 0.0
      %vm397 = vcmp.gt.f32.partialorder %v367, 0.0
      %vm398 = vcmp.gt.f32.partialorder %v368, 0.0
      %vm399 = vcmp.gt.f32.partialorder %v369, 0.0
      %vm400 = vcmp.gt.f32.partialorder %v370, 0.0
      %vm401 = vcmp.gt.f32.partialorder %v371, 0.0
      %vm402 = vcmp.gt.f32.partialorder %v372, 0.0
      %vm403 = vcmp.gt.f32.partialorder %v373, 0.0
      %vm404 = vcmp.gt.f32.partialorder %v374, 0.0
      %vm405 = vcmp.gt.f32.partialorder %v375, 0.0
      %vm406 = vcmp.gt.f32.partialorder %v376, 0.0
      %vm407 = vcmp.gt.f32.partialorder %v377, 0.0
      %vm408 = vcmp.gt.f32.partialorder %v378, 0.0
      %vm409 = vcmp.gt.f32.partialorder %v379, 0.0
      %vm410 = vcmp.gt.f32.partialorder %v380, 0.0
      %vm411 = vcmp.gt.f32.partialorder %v381, 0.0
      %vm412 = vcmp.gt.f32.partialorder %v382, 0.0
      %vm413 = vcmp.gt.f32.partialorder %v383, 0.0
      %vm414 = vcmp.gt.f32.partialorder %v384, 0.0
      %vm415 = vcmp.gt.f32.partialorder %v385, 0.0
      %vm416 = vcmp.gt.f32.partialorder %v386, 0.0
      %vm417 = vcmp.gt.f32.partialorder %v387, 0.0
      %vm418 = vcmp.gt.f32.partialorder %v388, 0.0
      %vm419 = vcmp.gt.f32.partialorder %v389, 0.0
      %vm420 = vcmp.gt.f32.partialorder %v390, 0.0
      %vm421 = vcmp.gt.f32.partialorder %v391, 0.0
      %vm422 = vcmp.gt.f32.partialorder %v392, 0.0
      %vm423 = vcmp.gt.f32.partialorder %v393, 0.0
      %vm424 = vcmp.gt.f32.partialorder %v394, 0.0
      %v425 = vmul.f32 %v365, 0.1
      %v426 = vmul.f32 %v366, 0.1
      %v427 = vmul.f32 %v367, 0.1
      %v428 = vmul.f32 %v368, 0.1
      %v429 = vmul.f32 %v369, 0.1
      %v430 = vmul.f32 %v370, 0.1
      %v431 = vmul.f32 %v371, 0.1
      %v432 = vmul.f32 %v372, 0.1
      %v433 = vmul.f32 %v373, 0.1
      %v434 = vmul.f32 %v374, 0.1
      %v435 = vmul.f32 %v375, 0.1
      %v436 = vmul.f32 %v376, 0.1
      %v437 = vmul.f32 %v377, 0.1
      %v438 = vmul.f32 %v378, 0.1
      %v439 = vmul.f32 %v379, 0.1
      %v440 = vmul.f32 %v380, 0.1
      %v441 = vmul.f32 %v381, 0.1
      %v442 = vmul.f32 %v382, 0.1
      %v443 = vmul.f32 %v383, 0.1
      %v444 = vmul.f32 %v384, 0.1
      %v445 = vmul.f32 %v385, 0.1
      %v446 = vmul.f32 %v386, 0.1
      %v447 = vmul.f32 %v387, 0.1
      %v448 = vmul.f32 %v388, 0.1
      %v449 = vmul.f32 %v389, 0.1
      %v450 = vmul.f32 %v390, 0.1
      %v451 = vmul.f32 %v391, 0.1
      %v452 = vmul.f32 %v392, 0.1
      %v453 = vmul.f32 %v393, 0.1
      %v454 = vmul.f32 %v394, 0.1
      %v455 = vsel %vm395, %v365, %v425
      %v456 = vsel %vm396, %v366, %v426
      %v457 = vsel %vm397, %v367, %v427
      %v458 = vsel %vm398, %v368, %v428
      %v459 = vsel %vm399, %v369, %v429
      %v460 = vsel %vm400, %v370, %v430
      %v461 = vsel %vm401, %v371, %v431
      %v462 = vsel %vm402, %v372, %v432
      %v463 = vsel %vm403, %v373, %v433
      %v464 = vsel %vm404, %v374, %v434
      %v465 = vsel %vm405, %v375, %v435
      %v466 = vsel %vm406, %v376, %v436
      %v467 = vsel %vm407, %v377, %v437
      %v468 = vsel %vm408, %v378, %v438
      %v469 = vsel %vm409, %v379, %v439
      %v470 = vsel %vm410, %v380, %v440
      %v471 = vsel %vm411, %v381, %v441
      %v472 = vsel %vm412, %v382, %v442
      %v473 = vsel %vm413, %v383, %v443
      %v474 = vsel %vm414, %v384, %v444
      %v475 = vsel %vm415, %v385, %v445
      %v476 = vsel %vm416, %v386, %v446
      %v477 = vsel %vm417, %v387, %v447
      %v478 = vsel %vm418, %v388, %v448
      %v479 = vsel %vm419, %v389, %v449
      %v480 = vsel %vm420, %v390, %v450
      %v481 = vsel %vm421, %v391, %v451
      %v482 = vsel %vm422, %v392, %v452
      %v483 = vsel %vm423, %v393, %v453
      %v484 = vsel %vm424, %v394, %v454
      %v485 = vstv %s202
      %v486 = vadd.s32 %v485, 1
      %v487 = vadd.s32 %v485, 2
      %v488 = vadd.s32 %v485, 3
      %v489 = vadd.s32 %v485, 4
      %v490 = vadd.s32 %v485, 5
      %v491 = vadd.s32 %v485, 6
      %v492 = vadd.s32 %v485, 7
      %v493 = vadd.s32 %v485, 8
      %v494 = vadd.s32 %v485, 9
      %v495 = vlaneseq
      %v496 = vshrl.u32 %v495, 7
      %v497 = vadd.s32 %v496, 8
      %v498 = vadd.s32 %v496, 16
      %vm499 = vcmp.ge.s32.totalorder %v485, 1
      %vm500 = vcmp.ge.s32.totalorder %v486, 1
      %vm501 = vcmp.ge.s32.totalorder %v487, 1
      %vm502 = vcmp.ge.s32.totalorder %v488, 1
      %vm503 = vcmp.ge.s32.totalorder %v489, 1
      %vm504 = vcmp.ge.s32.totalorder %v490, 1
      %vm505 = vcmp.ge.s32.totalorder %v491, 1
      %vm506 = vcmp.ge.s32.totalorder %v492, 1
      %vm507 = vcmp.ge.s32.totalorder %v493, 1
      %vm508 = vcmp.ge.s32.totalorder %v494, 1
      %vm509 = vcmp.le.s32.totalorder %v485, 16
      %vm510 = vcmp.le.s32.totalorder %v486, 16
      %vm511 = vcmp.le.s32.totalorder %v487, 16
      %vm512 = vcmp.le.s32.totalorder %v488, 16
      %vm513 = vcmp.le.s32.totalorder %v489, 16
      %vm514 = vcmp.le.s32.totalorder %v490, 16
      %vm515 = vcmp.le.s32.totalorder %v491, 16
      %vm516 = vcmp.le.s32.totalorder %v492, 16
      %vm517 = vcmp.le.s32.totalorder %v493, 16
      %vm518 = vcmp.le.s32.totalorder %v494, 16
      %vm519 = vmand %vm499, %vm509
      %vm520 = vmand %vm500, %vm510
      %vm521 = vmand %vm501, %vm511
      %vm522 = vmand %vm502, %vm512
      %vm523 = vmand %vm503, %vm513
      %vm524 = vmand %vm504, %vm514
      %vm525 = vmand %vm505, %vm515
      %vm526 = vmand %vm506, %vm516
      %vm527 = vmand %vm507, %vm517
      %vm528 = vmand %vm508, %vm518
      %vm529 = vcmp.ge.s32.totalorder %v496, 1
      %vm530 = vcmp.ge.s32.totalorder %v497, 1
      %vm531 = vcmp.ge.s32.totalorder %v498, 1
      %vm532 = vmand %vm519, %vm529
      %vm533 = vmand %vm519, %vm530
      %vm534 = vmand %vm519, %vm531
      %vm535 = vmand %vm520, %vm529
      %vm536 = vmand %vm520, %vm530
      %vm537 = vmand %vm520, %vm531
      %vm538 = vmand %vm521, %vm529
      %vm539 = vmand %vm521, %vm530
      %vm540 = vmand %vm521, %vm531
      %vm541 = vmand %vm522, %vm529
      %vm542 = vmand %vm522, %vm530
      %vm543 = vmand %vm522, %vm531
      %vm544 = vmand %vm523, %vm529
      %vm545 = vmand %vm523, %vm530
      %vm546 = vmand %vm523, %vm531
      %vm547 = vmand %vm524, %vm529
      %vm548 = vmand %vm524, %vm530
      %vm549 = vmand %vm524, %vm531
      %vm550 = vmand %vm525, %vm529
      %vm551 = vmand %vm525, %vm530
      %vm552 = vmand %vm525, %vm531
      %vm553 = vmand %vm526, %vm529
      %vm554 = vmand %vm526, %vm530
      %vm555 = vmand %vm526, %vm531
      %vm556 = vmand %vm527, %vm529
      %vm557 = vmand %vm527, %vm530
      %vm558 = vmand %vm527, %vm531
      %vm559 = vmand %vm528, %vm529
      %vm560 = vmand %vm528, %vm530
      %vm561 = vmand %vm528, %vm531
      %vm562 = vcmp.le.s32.totalorder %v496, 16
      %vm563 = vcmp.le.s32.totalorder %v497, 16
      %vm564 = vcmp.le.s32.totalorder %v498, 16
      %vm565 = vmand %vm532, %vm562
      %vm566 = vmand %vm533, %vm563
      %vm567 = vmand %vm534, %vm564
      %vm568 = vmand %vm535, %vm562
      %vm569 = vmand %vm536, %vm563
      %vm570 = vmand %vm537, %vm564
      %vm571 = vmand %vm538, %vm562
      %vm572 = vmand %vm539, %vm563
      %vm573 = vmand %vm540, %vm564
      %vm574 = vmand %vm541, %vm562
      %vm575 = vmand %vm542, %vm563
      %vm576 = vmand %vm543, %vm564
      %vm577 = vmand %vm544, %vm562
      %vm578 = vmand %vm545, %vm563
      %vm579 = vmand %vm546, %vm564
      %vm580 = vmand %vm547, %vm562
      %vm581 = vmand %vm548, %vm563
      %vm582 = vmand %vm549, %vm564
      %vm583 = vmand %vm550, %vm562
      %vm584 = vmand %vm551, %vm563
      %vm585 = vmand %vm552, %vm564
      %vm586 = vmand %vm553, %vm562
      %vm587 = vmand %vm554, %vm563
      %vm588 = vmand %vm555, %vm564
      %vm589 = vmand %vm556, %vm562
      %vm590 = vmand %vm557, %vm563
      %vm591 = vmand %vm558, %vm564
      %vm592 = vmand %vm559, %vm562
      %vm593 = vmand %vm560, %vm563
      %vm594 = vmand %vm561, %vm564
      %v595 = vsel %vm565, %v455, 0.0
      %v596 = vsel %vm566, %v456, 0.0
      %v597 = vsel %vm567, %v457, 0.0
      %v598 = vsel %vm568, %v458, 0.0
      %v599 = vsel %vm569, %v459, 0.0
      %v600 = vsel %vm570, %v460, 0.0
      %v601 = vsel %vm571, %v461, 0.0
      %v602 = vsel %vm572, %v462, 0.0
      %v603 = vsel %vm573, %v463, 0.0
      %v604 = vsel %vm574, %v464, 0.0
      %v605 = vsel %vm575, %v465, 0.0
      %v606 = vsel %vm576, %v466, 0.0
      %v607 = vsel %vm577, %v467, 0.0
      %v608 = vsel %vm578, %v468, 0.0
      %v609 = vsel %vm579, %v469, 0.0
      %v610 = vsel %vm580, %v470, 0.0
      %v611 = vsel %vm581, %v471, 0.0
      %v612 = vsel %vm582, %v472, 0.0
      %v613 = vsel %vm583, %v473, 0.0
      %v614 = vsel %vm584, %v474, 0.0
      %v615 = vsel %vm585, %v475, 0.0
      %v616 = vsel %vm586, %v476, 0.0
      %v617 = vsel %vm587, %v477, 0.0
      %v618 = vsel %vm588, %v478, 0.0
      %v619 = vsel %vm589, %v479, 0.0
      %v620 = vsel %vm590, %v480, 0.0
      %v621 = vsel %vm591, %v481, 0.0
      %v622 = vsel %vm592, %v482, 0.0
      %v623 = vsel %vm593, %v483, 0.0
      %v624 = vsel %vm594, %v484, 0.0
      %vm649 = vcmask 1046528
      %v650 = vrot.slane %v595, 1
      %v651 = vrot.slane %v596, 1
      %v652 = vsel %vm649, %v650, %v651
      %v653 = vrot.slane %v597, 1
      %v654 = vsel %vm649, %v651, %v653
      %v655 = vrot.slane %v598, 1
      %v656 = vrot.slane %v599, 1
      %v657 = vsel %vm649, %v655, %v656
      %v658 = vrot.slane %v600, 1
      %v659 = vsel %vm649, %v656, %v658
      %v660 = vrot.slane %v601, 1
      %v661 = vrot.slane %v602, 1
      %v662 = vsel %vm649, %v660, %v661
      %v663 = vrot.slane %v603, 1
      %v664 = vsel %vm649, %v661, %v663
      %v665 = vrot.slane %v604, 1
      %v666 = vrot.slane %v605, 1
      %v667 = vsel %vm649, %v665, %v666
      %v668 = vrot.slane %v606, 1
      %v669 = vsel %vm649, %v666, %v668
      %v670 = vrot.slane %v607, 1
      %v671 = vrot.slane %v608, 1
      %v672 = vsel %vm649, %v670, %v671
      %v673 = vrot.slane %v609, 1
      %v674 = vsel %vm649, %v671, %v673
      %v675 = vrot.slane %v610, 1
      %v676 = vrot.slane %v611, 1
      %v677 = vsel %vm649, %v675, %v676
      %v678 = vrot.slane %v612, 1
      %v679 = vsel %vm649, %v676, %v678
      %v680 = vrot.slane %v613, 1
      %v681 = vrot.slane %v614, 1
      %v682 = vsel %vm649, %v680, %v681
      %v683 = vrot.slane %v615, 1
      %v684 = vsel %vm649, %v681, %v683
      %v685 = vrot.slane %v616, 1
      %v686 = vrot.slane %v617, 1
      %v687 = vsel %vm649, %v685, %v686
      %v688 = vrot.slane %v618, 1
      %v689 = vsel %vm649, %v686, %v688
      %vm706 = vcmask 1045504
      %v707 = vrot.slane %v595, 2
      %v708 = vrot.slane %v596, 2
      %v709 = vsel %vm706, %v707, %v708
      %v710 = vrot.slane %v597, 2
      %v711 = vsel %vm706, %v708, %v710
      %v712 = vrot.slane %v598, 2
      %v713 = vrot.slane %v599, 2
      %v714 = vsel %vm706, %v712, %v713
      %v715 = vrot.slane %v600, 2
      %v716 = vsel %vm706, %v713, %v715
      %v717 = vrot.slane %v601, 2
      %v718 = vrot.slane %v602, 2
      %v719 = vsel %vm706, %v717, %v718
      %v720 = vrot.slane %v603, 2
      %v721 = vsel %vm706, %v718, %v720
      %v722 = vrot.slane %v604, 2
      %v723 = vrot.slane %v605, 2
      %v724 = vsel %vm706, %v722, %v723
      %v725 = vrot.slane %v606, 2
      %v726 = vsel %vm706, %v723, %v725
      %v727 = vrot.slane %v607, 2
      %v728 = vrot.slane %v608, 2
      %v729 = vsel %vm706, %v727, %v728
      %v730 = vrot.slane %v609, 2
      %v731 = vsel %vm706, %v728, %v730
      %v732 = vrot.slane %v610, 2
      %v733 = vrot.slane %v611, 2
      %v734 = vsel %vm706, %v732, %v733
      %v735 = vrot.slane %v612, 2
      %v736 = vsel %vm706, %v733, %v735
      %v737 = vrot.slane %v613, 2
      %v738 = vrot.slane %v614, 2
      %v739 = vsel %vm706, %v737, %v738
      %v740 = vrot.slane %v615, 2
      %v741 = vsel %vm706, %v738, %v740
      %v742 = vrot.slane %v616, 2
      %v743 = vrot.slane %v617, 2
      %v744 = vsel %vm706, %v742, %v743
      %v745 = vrot.slane %v618, 2
      %v746 = vsel %vm706, %v743, %v745
      %v766 = vrot.slane %v619, 1
      %v767 = vrot.slane %v620, 1
      %v768 = vsel %vm649, %v766, %v767
      %v769 = vrot.slane %v621, 1
      %v770 = vsel %vm649, %v767, %v769
      %v773 = vrot.slane %v619, 2
      %v774 = vrot.slane %v620, 2
      %v775 = vsel %vm706, %v773, %v774
      %v776 = vrot.slane %v621, 2
      %v777 = vsel %vm706, %v774, %v776
      %v783 = vrot.slane %v622, 1
      %v784 = vrot.slane %v623, 1
      %v785 = vsel %vm649, %v783, %v784
      %v786 = vrot.slane %v624, 1
      %v787 = vsel %vm649, %v784, %v786
      %v790 = vrot.slane %v622, 2
      %v791 = vrot.slane %v623, 2
      %v792 = vsel %vm706, %v790, %v791
      %v793 = vrot.slane %v624, 2
      %v794 = vsel %vm706, %v791, %v793
      %v797 = vld [vmem:[%s3] sm:$0xff]
      %v798 = vld [vmem:[%s3 + $0x8] sm:$0xff]
      %v799 = vld [vmem:[%s3 + $0x10] sm:$0xff]
      %v800 = vld [vmem:[%s3 + $0x18] sm:$0xff]
      %v801 = vld [vmem:[%s3 + $0x20] sm:$0xff]
      %v802 = vld [vmem:[%s3 + $0x28] sm:$0xff]
      %v803 = vld [vmem:[%s3 + $0x30] sm:$0xff]
      %v804 = vld [vmem:[%s3 + $0x38] sm:$0xff]
      %v805 = vld [vmem:[%s3 + $0x40] sm:$0xff]
      %v806 = vld [vmem:[%s3 + $0x48] sm:$0xff]
      %v807 = vld [vmem:[%s3 + $0x50] sm:$0xff]
      %v808 = vld [vmem:[%s3 + $0x58] sm:$0xff]
      %v809 = vld [vmem:[%s3 + $0x60] sm:$0xff]
      %v810 = vld [vmem:[%s3 + $0x68] sm:$0xff]
      %v811 = vld [vmem:[%s3 + $0x70] sm:$0xff]
      %v812 = vld [vmem:[%s3 + $0x78] sm:$0xff]
      %v813 = vld [vmem:[%s3 + $0x80] sm:$0xff]
      %v814 = vld [vmem:[%s3 + $0x88] sm:$0xff]
      %v815 = vld [vmem:[%s3 + $0x90] sm:$0xff]
      %v816 = vld [vmem:[%s3 + $0x98] sm:$0xff]
      %v817 = vld [vmem:[%s3 + $0xa0] sm:$0xff]
      %v818 = vld [vmem:[%s3 + $0xa8] sm:$0xff]
      %v819 = vld [vmem:[%s3 + $0xb0] sm:$0xff]
      %v820 = vld [vmem:[%s3 + $0xb8] sm:$0xff]
      %v821 = vld [vmem:[%s3 + $0xc0] sm:$0xff]
      %v822 = vld [vmem:[%s3 + $0xc8] sm:$0xff]
      %v823 = vld [vmem:[%s3 + $0xd0] sm:$0xff]
      %v824 = vld [vmem:[%s3 + $0xd8] sm:$0xff]
      %v825 = vld [vmem:[%s3 + $0xe0] sm:$0xff]
      %v826 = vld [vmem:[%s3 + $0xe8] sm:$0xff]
      %v827 = vld [vmem:[%s3 + $0xf0] sm:$0xff]
      %v828 = vld [vmem:[%s3 + $0xf8] sm:$0xff]
      %v829 = vld [vmem:[%s3 + $0x100] sm:$0xff]
      %v830 = vld [vmem:[%s3 + $0x108] sm:$0xff]
      %v831 = vld [vmem:[%s3 + $0x110] sm:$0xff]
      %v832 = vld [vmem:[%s3 + $0x118] sm:$0xff]
      %v833 = vld [vmem:[%s3 + $0x120] sm:$0xff]
      %v834 = vld [vmem:[%s3 + $0x128] sm:$0xff]
      %v835 = vld [vmem:[%s3 + $0x130] sm:$0xff]
      %v836 = vld [vmem:[%s3 + $0x138] sm:$0xff]
      %v837 = vld [vmem:[%s3 + $0x140] sm:$0xff]
      %v838 = vld [vmem:[%s3 + $0x148] sm:$0xff]
      %v839 = vld [vmem:[%s3 + $0x150] sm:$0xff]
      %v840 = vld [vmem:[%s3 + $0x158] sm:$0xff]
      %v841 = vld [vmem:[%s3 + $0x160] sm:$0xff]
      %v842 = vld [vmem:[%s3 + $0x168] sm:$0xff]
      %v843 = vld [vmem:[%s3 + $0x170] sm:$0xff]
      %v844 = vld [vmem:[%s3 + $0x178] sm:$0xff]
      %v845 = vld [vmem:[%s3 + $0x180] sm:$0xff]
      %v846 = vld [vmem:[%s3 + $0x188] sm:$0xff]
      %v847 = vld [vmem:[%s3 + $0x190] sm:$0xff]
      %v848 = vld [vmem:[%s3 + $0x198] sm:$0xff]
      %v849 = vld [vmem:[%s3 + $0x1a0] sm:$0xff]
      %v850 = vld [vmem:[%s3 + $0x1a8] sm:$0xff]
      %v851 = vld [vmem:[%s3 + $0x1b0] sm:$0xff]
      %v852 = vld [vmem:[%s3 + $0x1b8] sm:$0xff]
      %v853 = vld [vmem:[%s3 + $0x1c0] sm:$0xff]
      %v854 = vld [vmem:[%s3 + $0x1c8] sm:$0xff]
      %v855 = vld [vmem:[%s3 + $0x1d0] sm:$0xff]
      %v856 = vld [vmem:[%s3 + $0x1d8] sm:$0xff]
      %v857 = vld [vmem:[%s3 + $0x1e0] sm:$0xff]
      %v858 = vld [vmem:[%s3 + $0x1e8] sm:$0xff]
      %v859 = vld [vmem:[%s3 + $0x1f0] sm:$0xff]
      %v860 = vld [vmem:[%s3 + $0x1f8] sm:$0xff]
      %v861 = vld [vmem:[%s3 + $0x200] sm:$0xff]
      %v862 = vld [vmem:[%s3 + $0x208] sm:$0xff]
      %v863 = vld [vmem:[%s3 + $0x210] sm:$0xff]
      %v864 = vld [vmem:[%s3 + $0x218] sm:$0xff]
      %v865 = vld [vmem:[%s3 + $0x220] sm:$0xff]
      %v866 = vld [vmem:[%s3 + $0x228] sm:$0xff]
      %v867 = vld [vmem:[%s3 + $0x230] sm:$0xff]
      %v868 = vld [vmem:[%s3 + $0x238] sm:$0xff]
      %v869 = vld [vmem:[%s3 + $0x240] sm:$0xff]
      %v870 = vld [vmem:[%s3 + $0x248] sm:$0xff]
      %v871 = vld [vmem:[%s3 + $0x250] sm:$0xff]
      %v872 = vld [vmem:[%s3 + $0x258] sm:$0xff]
      %v873 = vld [vmem:[%s3 + $0x260] sm:$0xff]
      %v874 = vld [vmem:[%s3 + $0x268] sm:$0xff]
      %v875 = vld [vmem:[%s3 + $0x270] sm:$0xff]
      %v876 = vld [vmem:[%s3 + $0x278] sm:$0xff]
      %v877 = vld [vmem:[%s3 + $0x280] sm:$0xff]
      %v878 = vld [vmem:[%s3 + $0x288] sm:$0xff]
      %v879 = vld [vmem:[%s3 + $0x290] sm:$0xff]
      %v880 = vld [vmem:[%s3 + $0x298] sm:$0xff]
      %v881 = vld [vmem:[%s3 + $0x2a0] sm:$0xff]
      %v882 = vld [vmem:[%s3 + $0x2a8] sm:$0xff]
      %v883 = vld [vmem:[%s3 + $0x2b0] sm:$0xff]
      %v884 = vld [vmem:[%s3 + $0x2b8] sm:$0xff]
      %v885 = vld [vmem:[%s3 + $0x2c0] sm:$0xff]
      %v886 = vld [vmem:[%s3 + $0x2c8] sm:$0xff]
      %v887 = vld [vmem:[%s3 + $0x2d0] sm:$0xff]
      %v888 = vld [vmem:[%s3 + $0x2d8] sm:$0xff]
      %v889 = vld [vmem:[%s3 + $0x2e0] sm:$0xff]
      %v890 = vld [vmem:[%s3 + $0x2e8] sm:$0xff]
      %v891 = vld [vmem:[%s3 + $0x2f0] sm:$0xff]
      %v892 = vld [vmem:[%s3 + $0x2f8] sm:$0xff]
      %v893 = vld [vmem:[%s3 + $0x300] sm:$0xff]
      %v894 = vld [vmem:[%s3 + $0x308] sm:$0xff]
      %v895 = vld [vmem:[%s3 + $0x310] sm:$0xff]
      %v896 = vld [vmem:[%s3 + $0x318] sm:$0xff]
      %v897 = vld [vmem:[%s3 + $0x320] sm:$0xff]
      %v898 = vld [vmem:[%s3 + $0x328] sm:$0xff]
      %v899 = vld [vmem:[%s3 + $0x330] sm:$0xff]
      %v900 = vld [vmem:[%s3 + $0x338] sm:$0xff]
      %v901 = vld [vmem:[%s3 + $0x340] sm:$0xff]
      %v902 = vld [vmem:[%s3 + $0x348] sm:$0xff]
      %v903 = vld [vmem:[%s3 + $0x350] sm:$0xff]
      %v904 = vld [vmem:[%s3 + $0x358] sm:$0xff]
      %v905 = vld [vmem:[%s3 + $0x360] sm:$0xff]
      %v906 = vld [vmem:[%s3 + $0x368] sm:$0xff]
      %v907 = vld [vmem:[%s3 + $0x370] sm:$0xff]
      %v908 = vld [vmem:[%s3 + $0x378] sm:$0xff]
      %v909 = vld [vmem:[%s3 + $0x380] sm:$0xff]
      %v910 = vld [vmem:[%s3 + $0x388] sm:$0xff]
      %v911 = vld [vmem:[%s3 + $0x390] sm:$0xff]
      %v912 = vld [vmem:[%s3 + $0x398] sm:$0xff]
      %v913 = vld [vmem:[%s3 + $0x3a0] sm:$0xff]
      %v914 = vld [vmem:[%s3 + $0x3a8] sm:$0xff]
      %v915 = vld [vmem:[%s3 + $0x3b0] sm:$0xff]
      %v916 = vld [vmem:[%s3 + $0x3b8] sm:$0xff]
      %v917 = vld [vmem:[%s3 + $0x3c0] sm:$0xff]
      %v918 = vld [vmem:[%s3 + $0x3c8] sm:$0xff]
      %v919 = vld [vmem:[%s3 + $0x3d0] sm:$0xff]
      %v920 = vld [vmem:[%s3 + $0x3d8] sm:$0xff]
      %v921 = vld [vmem:[%s3 + $0x3e0] sm:$0xff]
      %v922 = vld [vmem:[%s3 + $0x3e8] sm:$0xff]
      %v923 = vld [vmem:[%s3 + $0x3f0] sm:$0xff]
      %v924 = vld [vmem:[%s3 + $0x3f8] sm:$0xff]
      %v925 = vld [vmem:[%s3 + $0x400] sm:$0xff]
      %v926 = vld [vmem:[%s3 + $0x408] sm:$0xff]
      %v927 = vld [vmem:[%s3 + $0x410] sm:$0xff]
      %v928 = vld [vmem:[%s3 + $0x418] sm:$0xff]
      %v929 = vld [vmem:[%s3 + $0x420] sm:$0xff]
      %v930 = vld [vmem:[%s3 + $0x428] sm:$0xff]
      %v931 = vld [vmem:[%s3 + $0x430] sm:$0xff]
      %v932 = vld [vmem:[%s3 + $0x438] sm:$0xff]
      %v933 = vld [vmem:[%s3 + $0x440] sm:$0xff]
      %v934 = vld [vmem:[%s3 + $0x448] sm:$0xff]
      %v935 = vld [vmem:[%s3 + $0x450] sm:$0xff]
      %v936 = vld [vmem:[%s3 + $0x458] sm:$0xff]
      %v937 = vld [vmem:[%s3 + $0x460] sm:$0xff]
      %v938 = vld [vmem:[%s3 + $0x468] sm:$0xff]
      %v939 = vld [vmem:[%s3 + $0x470] sm:$0xff]
      %v940 = vld [vmem:[%s3 + $0x478] sm:$0xff]
      %941 = vmatpush.msra.mxu0 %v812
      %942 = vmatpush.msra.mxu0 %v811
      %943 = vmatpush.msra.mxu0 %v810
      %944 = vmatpush.msra.mxu0 %v809
      %945 = vmatpush.msra.mxu0 %v808
      %946 = vmatpush.msra.mxu0 %v807
      %947 = vmatpush.msra.mxu0 %v806
      %948 = vmatpush.msra.mxu0 %v805
      %949 = vmatpush.msra.mxu0 %v804
      %950 = vmatpush.msra.mxu0 %v803
      %951 = vmatpush.msra.mxu0 %v802
      %952 = vmatpush.msra.mxu0 %v801
      %953 = vmatpush.msra.mxu0 %v800
      %954 = vmatpush.msra.mxu0 %v799
      %955 = vmatpush.msra.mxu0 %v798
      %956 = vmatpush.msra.mxu0 %v797
      %957 = vmatmul.f32.gmra.mxu0 %v595
      %v958 = vpop.f32.mrf.mxu0
      %v959 = vadd.f32 0.0, %v958
      %960 = vmatmul.f32.gmra.mxu0 %v596
      %v961 = vpop.f32.mrf.mxu0
      %v962 = vadd.f32 0.0, %v961
      %963 = vmatmul.f32.gmra.mxu0 %v598
      %v964 = vpop.f32.mrf.mxu0
      %v965 = vadd.f32 0.0, %v964
      %966 = vmatmul.f32.gmra.mxu0 %v599
      %v967 = vpop.f32.mrf.mxu0
      %v968 = vadd.f32 0.0, %v967
      %969 = vmatmul.f32.gmra.mxu0 %v601
      %v970 = vpop.f32.mrf.mxu0
      %v971 = vadd.f32 0.0, %v970
      %972 = vmatmul.f32.gmra.mxu0 %v602
      %v973 = vpop.f32.mrf.mxu0
      %v974 = vadd.f32 0.0, %v973
      %975 = vmatmul.f32.gmra.mxu0 %v604
      %v976 = vpop.f32.mrf.mxu0
      %v977 = vadd.f32 0.0, %v976
      %978 = vmatmul.f32.gmra.mxu0 %v605
      %v979 = vpop.f32.mrf.mxu0
      %v980 = vadd.f32 0.0, %v979
      %981 = vmatmul.f32.gmra.mxu0 %v607
      %v982 = vpop.f32.mrf.mxu0
      %v983 = vadd.f32 0.0, %v982
      %984 = vmatmul.f32.gmra.mxu0 %v608
      %v985 = vpop.f32.mrf.mxu0
      %v986 = vadd.f32 0.0, %v985
      %987 = vmatmul.f32.gmra.mxu0 %v610
      %v988 = vpop.f32.mrf.mxu0
      %v989 = vadd.f32 0.0, %v988
      %990 = vmatmul.f32.gmra.mxu0 %v611
      %v991 = vpop.f32.mrf.mxu0
      %v992 = vadd.f32 0.0, %v991
      %993 = vmatmul.f32.gmra.mxu0 %v613
      %v994 = vpop.f32.mrf.mxu0
      %v995 = vadd.f32 0.0, %v994
      %996 = vmatmul.f32.gmra.mxu0 %v614
      %v997 = vpop.f32.mrf.mxu0
      %v998 = vadd.f32 0.0, %v997
      %999 = vmatmul.f32.gmra.mxu0 %v616
      %v1000 = vpop.f32.mrf.mxu0
      %v1001 = vadd.f32 0.0, %v1000
      %1002 = vmatmul.f32.gmra.mxu0 %v617
      %v1003 = vpop.f32.mrf.mxu0
      %v1004 = vadd.f32 0.0, %v1003
      %1005 = vdwg.mxu0
      %1006 = vmatpush.msra.mxu0 %v828
      %1007 = vmatpush.msra.mxu0 %v827
      %1008 = vmatpush.msra.mxu0 %v826
      %1009 = vmatpush.msra.mxu0 %v825
      %1010 = vmatpush.msra.mxu0 %v824
      %1011 = vmatpush.msra.mxu0 %v823
      %1012 = vmatpush.msra.mxu0 %v822
      %1013 = vmatpush.msra.mxu0 %v821
      %1014 = vmatpush.msra.mxu0 %v820
      %1015 = vmatpush.msra.mxu0 %v819
      %1016 = vmatpush.msra.mxu0 %v818
      %1017 = vmatpush.msra.mxu0 %v817
      %1018 = vmatpush.msra.mxu0 %v816
      %1019 = vmatpush.msra.mxu0 %v815
      %1020 = vmatpush.msra.mxu0 %v814
      %1021 = vmatpush.msra.mxu0 %v813
      %1022 = vmatmul.f32.gmra.mxu0 %v652
      %v1023 = vpop.f32.mrf.mxu0
      %v1024 = vadd.f32 %v959, %v1023
      %1025 = vmatmul.f32.gmra.mxu0 %v654
      %v1026 = vpop.f32.mrf.mxu0
      %v1027 = vadd.f32 %v962, %v1026
      %1028 = vmatmul.f32.gmra.mxu0 %v657
      %v1029 = vpop.f32.mrf.mxu0
      %v1030 = vadd.f32 %v965, %v1029
      %1031 = vmatmul.f32.gmra.mxu0 %v659
      %v1032 = vpop.f32.mrf.mxu0
      %v1033 = vadd.f32 %v968, %v1032
      %1034 = vmatmul.f32.gmra.mxu0 %v662
      %v1035 = vpop.f32.mrf.mxu0
      %v1036 = vadd.f32 %v971, %v1035
      %1037 = vmatmul.f32.gmra.mxu0 %v664
      %v1038 = vpop.f32.mrf.mxu0
      %v1039 = vadd.f32 %v974, %v1038
      %1040 = vmatmul.f32.gmra.mxu0 %v667
      %v1041 = vpop.f32.mrf.mxu0
      %v1042 = vadd.f32 %v977, %v1041
      %1043 = vmatmul.f32.gmra.mxu0 %v669
      %v1044 = vpop.f32.mrf.mxu0
      %v1045 = vadd.f32 %v980, %v1044
      %1046 = vmatmul.f32.gmra.mxu0 %v672
      %v1047 = vpop.f32.mrf.mxu0
      %v1048 = vadd.f32 %v983, %v1047
      %1049 = vmatmul.f32.gmra.mxu0 %v674
      %v1050 = vpop.f32.mrf.mxu0
      %v1051 = vadd.f32 %v986, %v1050
      %1052 = vmatmul.f32.gmra.mxu0 %v677
      %v1053 = vpop.f32.mrf.mxu0
      %v1054 = vadd.f32 %v989, %v1053
      %1055 = vmatmul.f32.gmra.mxu0 %v679
      %v1056 = vpop.f32.mrf.mxu0
      %v1057 = vadd.f32 %v992, %v1056
      %1058 = vmatmul.f32.gmra.mxu0 %v682
      %v1059 = vpop.f32.mrf.mxu0
      %v1060 = vadd.f32 %v995, %v1059
      %1061 = vmatmul.f32.gmra.mxu0 %v684
      %v1062 = vpop.f32.mrf.mxu0
      %v1063 = vadd.f32 %v998, %v1062
      %1064 = vmatmul.f32.gmra.mxu0 %v687
      %v1065 = vpop.f32.mrf.mxu0
      %v1066 = vadd.f32 %v1001, %v1065
      %1067 = vmatmul.f32.gmra.mxu0 %v689
      %v1068 = vpop.f32.mrf.mxu0
      %v1069 = vadd.f32 %v1004, %v1068
      %1070 = vdwg.mxu0
      %1071 = vmatpush.msra.mxu0 %v844
      %1072 = vmatpush.msra.mxu0 %v843
      %1073 = vmatpush.msra.mxu0 %v842
      %1074 = vmatpush.msra.mxu0 %v841
      %1075 = vmatpush.msra.mxu0 %v840
      %1076 = vmatpush.msra.mxu0 %v839
      %1077 = vmatpush.msra.mxu0 %v838
      %1078 = vmatpush.msra.mxu0 %v837
      %1079 = vmatpush.msra.mxu0 %v836
      %1080 = vmatpush.msra.mxu0 %v835
      %1081 = vmatpush.msra.mxu0 %v834
      %1082 = vmatpush.msra.mxu0 %v833
      %1083 = vmatpush.msra.mxu0 %v832
      %1084 = vmatpush.msra.mxu0 %v831
      %1085 = vmatpush.msra.mxu0 %v830
      %1086 = vmatpush.msra.mxu0 %v829
      %1087 = vmatmul.f32.gmra.mxu0 %v709
      %v1088 = vpop.f32.mrf.mxu0
      %v1089 = vadd.f32 %v1024, %v1088
      %1090 = vmatmul.f32.gmra.mxu0 %v711
      %v1091 = vpop.f32.mrf.mxu0
      %v1092 = vadd.f32 %v1027, %v1091
      %1093 = vmatmul.f32.gmra.mxu0 %v714
      %v1094 = vpop.f32.mrf.mxu0
      %v1095 = vadd.f32 %v1030, %v1094
      %1096 = vmatmul.f32.gmra.mxu0 %v716
      %v1097 = vpop.f32.mrf.mxu0
      %v1098 = vadd.f32 %v1033, %v1097
      %1099 = vmatmul.f32.gmra.mxu0 %v719
      %v1100 = vpop.f32.mrf.mxu0
      %v1101 = vadd.f32 %v1036, %v1100
      %1102 = vmatmul.f32.gmra.mxu0 %v721
      %v1103 = vpop.f32.mrf.mxu0
      %v1104 = vadd.f32 %v1039, %v1103
      %1105 = vmatmul.f32.gmra.mxu0 %v724
      %v1106 = vpop.f32.mrf.mxu0
      %v1107 = vadd.f32 %v1042, %v1106
      %1108 = vmatmul.f32.gmra.mxu0 %v726
      %v1109 = vpop.f32.mrf.mxu0
      %v1110 = vadd.f32 %v1045, %v1109
      %1111 = vmatmul.f32.gmra.mxu0 %v729
      %v1112 = vpop.f32.mrf.mxu0
      %v1113 = vadd.f32 %v1048, %v1112
      %1114 = vmatmul.f32.gmra.mxu0 %v731
      %v1115 = vpop.f32.mrf.mxu0
      %v1116 = vadd.f32 %v1051, %v1115
      %1117 = vmatmul.f32.gmra.mxu0 %v734
      %v1118 = vpop.f32.mrf.mxu0
      %v1119 = vadd.f32 %v1054, %v1118
      %1120 = vmatmul.f32.gmra.mxu0 %v736
      %v1121 = vpop.f32.mrf.mxu0
      %v1122 = vadd.f32 %v1057, %v1121
      %1123 = vmatmul.f32.gmra.mxu0 %v739
      %v1124 = vpop.f32.mrf.mxu0
      %v1125 = vadd.f32 %v1060, %v1124
      %1126 = vmatmul.f32.gmra.mxu0 %v741
      %v1127 = vpop.f32.mrf.mxu0
      %v1128 = vadd.f32 %v1063, %v1127
      %1129 = vmatmul.f32.gmra.mxu0 %v744
      %v1130 = vpop.f32.mrf.mxu0
      %v1131 = vadd.f32 %v1066, %v1130
      %1132 = vmatmul.f32.gmra.mxu0 %v746
      %v1133 = vpop.f32.mrf.mxu0
      %v1134 = vadd.f32 %v1069, %v1133
      %1135 = vdwg.mxu0
      %1136 = vmatpush.msra.mxu0 %v860
      %1137 = vmatpush.msra.mxu0 %v859
      %1138 = vmatpush.msra.mxu0 %v858
      %1139 = vmatpush.msra.mxu0 %v857
      %1140 = vmatpush.msra.mxu0 %v856
      %1141 = vmatpush.msra.mxu0 %v855
      %1142 = vmatpush.msra.mxu0 %v854
      %1143 = vmatpush.msra.mxu0 %v853
      %1144 = vmatpush.msra.mxu0 %v852
      %1145 = vmatpush.msra.mxu0 %v851
      %1146 = vmatpush.msra.mxu0 %v850
      %1147 = vmatpush.msra.mxu0 %v849
      %1148 = vmatpush.msra.mxu0 %v848
      %1149 = vmatpush.msra.mxu0 %v847
      %1150 = vmatpush.msra.mxu0 %v846
      %1151 = vmatpush.msra.mxu0 %v845
      %1152 = vmatmul.f32.gmra.mxu0 %v598
      %v1153 = vpop.f32.mrf.mxu0
      %v1154 = vadd.f32 %v1089, %v1153
      %1155 = vmatmul.f32.gmra.mxu0 %v599
      %v1156 = vpop.f32.mrf.mxu0
      %v1157 = vadd.f32 %v1092, %v1156
      %1158 = vmatmul.f32.gmra.mxu0 %v601
      %v1159 = vpop.f32.mrf.mxu0
      %v1160 = vadd.f32 %v1095, %v1159
      %1161 = vmatmul.f32.gmra.mxu0 %v602
      %v1162 = vpop.f32.mrf.mxu0
      %v1163 = vadd.f32 %v1098, %v1162
      %1164 = vmatmul.f32.gmra.mxu0 %v604
      %v1165 = vpop.f32.mrf.mxu0
      %v1166 = vadd.f32 %v1101, %v1165
      %1167 = vmatmul.f32.gmra.mxu0 %v605
      %v1168 = vpop.f32.mrf.mxu0
      %v1169 = vadd.f32 %v1104, %v1168
      %1170 = vmatmul.f32.gmra.mxu0 %v607
      %v1171 = vpop.f32.mrf.mxu0
      %v1172 = vadd.f32 %v1107, %v1171
      %1173 = vmatmul.f32.gmra.mxu0 %v608
      %v1174 = vpop.f32.mrf.mxu0
      %v1175 = vadd.f32 %v1110, %v1174
      %1176 = vmatmul.f32.gmra.mxu0 %v610
      %v1177 = vpop.f32.mrf.mxu0
      %v1178 = vadd.f32 %v1113, %v1177
      %1179 = vmatmul.f32.gmra.mxu0 %v611
      %v1180 = vpop.f32.mrf.mxu0
      %v1181 = vadd.f32 %v1116, %v1180
      %1182 = vmatmul.f32.gmra.mxu0 %v613
      %v1183 = vpop.f32.mrf.mxu0
      %v1184 = vadd.f32 %v1119, %v1183
      %1185 = vmatmul.f32.gmra.mxu0 %v614
      %v1186 = vpop.f32.mrf.mxu0
      %v1187 = vadd.f32 %v1122, %v1186
      %1188 = vmatmul.f32.gmra.mxu0 %v616
      %v1189 = vpop.f32.mrf.mxu0
      %v1190 = vadd.f32 %v1125, %v1189
      %1191 = vmatmul.f32.gmra.mxu0 %v617
      %v1192 = vpop.f32.mrf.mxu0
      %v1193 = vadd.f32 %v1128, %v1192
      %1194 = vmatmul.f32.gmra.mxu0 %v619
      %v1195 = vpop.f32.mrf.mxu0
      %v1196 = vadd.f32 %v1131, %v1195
      %1197 = vmatmul.f32.gmra.mxu0 %v620
      %v1198 = vpop.f32.mrf.mxu0
      %v1199 = vadd.f32 %v1134, %v1198
      %1200 = vdwg.mxu0
      %1201 = vmatpush.msra.mxu0 %v876
      %1202 = vmatpush.msra.mxu0 %v875
      %1203 = vmatpush.msra.mxu0 %v874
      %1204 = vmatpush.msra.mxu0 %v873
      %1205 = vmatpush.msra.mxu0 %v872
      %1206 = vmatpush.msra.mxu0 %v871
      %1207 = vmatpush.msra.mxu0 %v870
      %1208 = vmatpush.msra.mxu0 %v869
      %1209 = vmatpush.msra.mxu0 %v868
      %1210 = vmatpush.msra.mxu0 %v867
      %1211 = vmatpush.msra.mxu0 %v866
      %1212 = vmatpush.msra.mxu0 %v865
      %1213 = vmatpush.msra.mxu0 %v864
      %1214 = vmatpush.msra.mxu0 %v863
      %1215 = vmatpush.msra.mxu0 %v862
      %1216 = vmatpush.msra.mxu0 %v861
      %1217 = vmatmul.f32.gmra.mxu0 %v657
      %v1218 = vpop.f32.mrf.mxu0
      %v1219 = vadd.f32 %v1154, %v1218
      %1220 = vmatmul.f32.gmra.mxu0 %v659
      %v1221 = vpop.f32.mrf.mxu0
      %v1222 = vadd.f32 %v1157, %v1221
      %1223 = vmatmul.f32.gmra.mxu0 %v662
      %v1224 = vpop.f32.mrf.mxu0
      %v1225 = vadd.f32 %v1160, %v1224
      %1226 = vmatmul.f32.gmra.mxu0 %v664
      %v1227 = vpop.f32.mrf.mxu0
      %v1228 = vadd.f32 %v1163, %v1227
      %1229 = vmatmul.f32.gmra.mxu0 %v667
      %v1230 = vpop.f32.mrf.mxu0
      %v1231 = vadd.f32 %v1166, %v1230
      %1232 = vmatmul.f32.gmra.mxu0 %v669
      %v1233 = vpop.f32.mrf.mxu0
      %v1234 = vadd.f32 %v1169, %v1233
      %1235 = vmatmul.f32.gmra.mxu0 %v672
      %v1236 = vpop.f32.mrf.mxu0
      %v1237 = vadd.f32 %v1172, %v1236
      %1238 = vmatmul.f32.gmra.mxu0 %v674
      %v1239 = vpop.f32.mrf.mxu0
      %v1240 = vadd.f32 %v1175, %v1239
      %1241 = vmatmul.f32.gmra.mxu0 %v677
      %v1242 = vpop.f32.mrf.mxu0
      %v1243 = vadd.f32 %v1178, %v1242
      %1244 = vmatmul.f32.gmra.mxu0 %v679
      %v1245 = vpop.f32.mrf.mxu0
      %v1246 = vadd.f32 %v1181, %v1245
      %1247 = vmatmul.f32.gmra.mxu0 %v682
      %v1248 = vpop.f32.mrf.mxu0
      %v1249 = vadd.f32 %v1184, %v1248
      %1250 = vmatmul.f32.gmra.mxu0 %v684
      %v1251 = vpop.f32.mrf.mxu0
      %v1252 = vadd.f32 %v1187, %v1251
      %1253 = vmatmul.f32.gmra.mxu0 %v687
      %v1254 = vpop.f32.mrf.mxu0
      %v1255 = vadd.f32 %v1190, %v1254
      %1256 = vmatmul.f32.gmra.mxu0 %v689
      %v1257 = vpop.f32.mrf.mxu0
      %v1258 = vadd.f32 %v1193, %v1257
      %1259 = vmatmul.f32.gmra.mxu0 %v768
      %v1260 = vpop.f32.mrf.mxu0
      %v1261 = vadd.f32 %v1196, %v1260
      %1262 = vmatmul.f32.gmra.mxu0 %v770
      %v1263 = vpop.f32.mrf.mxu0
      %v1264 = vadd.f32 %v1199, %v1263
      %1265 = vdwg.mxu0
      %1266 = vmatpush.msra.mxu0 %v892
      %1267 = vmatpush.msra.mxu0 %v891
      %1268 = vmatpush.msra.mxu0 %v890
      %1269 = vmatpush.msra.mxu0 %v889
      %1270 = vmatpush.msra.mxu0 %v888
      %1271 = vmatpush.msra.mxu0 %v887
      %1272 = vmatpush.msra.mxu0 %v886
      %1273 = vmatpush.msra.mxu0 %v885
      %1274 = vmatpush.msra.mxu0 %v884
      %1275 = vmatpush.msra.mxu0 %v883
      %1276 = vmatpush.msra.mxu0 %v882
      %1277 = vmatpush.msra.mxu0 %v881
      %1278 = vmatpush.msra.mxu0 %v880
      %1279 = vmatpush.msra.mxu0 %v879
      %1280 = vmatpush.msra.mxu0 %v878
      %1281 = vmatpush.msra.mxu0 %v877
      %1282 = vmatmul.f32.gmra.mxu0 %v714
      %v1283 = vpop.f32.mrf.mxu0
      %v1284 = vadd.f32 %v1219, %v1283
      %1285 = vmatmul.f32.gmra.mxu0 %v716
      %v1286 = vpop.f32.mrf.mxu0
      %v1287 = vadd.f32 %v1222, %v1286
      %1288 = vmatmul.f32.gmra.mxu0 %v719
      %v1289 = vpop.f32.mrf.mxu0
      %v1290 = vadd.f32 %v1225, %v1289
      %1291 = vmatmul.f32.gmra.mxu0 %v721
      %v1292 = vpop.f32.mrf.mxu0
      %v1293 = vadd.f32 %v1228, %v1292
      %1294 = vmatmul.f32.gmra.mxu0 %v724
      %v1295 = vpop.f32.mrf.mxu0
      %v1296 = vadd.f32 %v1231, %v1295
      %1297 = vmatmul.f32.gmra.mxu0 %v726
      %v1298 = vpop.f32.mrf.mxu0
      %v1299 = vadd.f32 %v1234, %v1298
      %1300 = vmatmul.f32.gmra.mxu0 %v729
      %v1301 = vpop.f32.mrf.mxu0
      %v1302 = vadd.f32 %v1237, %v1301
      %1303 = vmatmul.f32.gmra.mxu0 %v731
      %v1304 = vpop.f32.mrf.mxu0
      %v1305 = vadd.f32 %v1240, %v1304
      %1306 = vmatmul.f32.gmra.mxu0 %v734
      %v1307 = vpop.f32.mrf.mxu0
      %v1308 = vadd.f32 %v1243, %v1307
      %1309 = vmatmul.f32.gmra.mxu0 %v736
      %v1310 = vpop.f32.mrf.mxu0
      %v1311 = vadd.f32 %v1246, %v1310
      %1312 = vmatmul.f32.gmra.mxu0 %v739
      %v1313 = vpop.f32.mrf.mxu0
      %v1314 = vadd.f32 %v1249, %v1313
      %1315 = vmatmul.f32.gmra.mxu0 %v741
      %v1316 = vpop.f32.mrf.mxu0
      %v1317 = vadd.f32 %v1252, %v1316
      %1318 = vmatmul.f32.gmra.mxu0 %v744
      %v1319 = vpop.f32.mrf.mxu0
      %v1320 = vadd.f32 %v1255, %v1319
      %1321 = vmatmul.f32.gmra.mxu0 %v746
      %v1322 = vpop.f32.mrf.mxu0
      %v1323 = vadd.f32 %v1258, %v1322
      %1324 = vmatmul.f32.gmra.mxu0 %v775
      %v1325 = vpop.f32.mrf.mxu0
      %v1326 = vadd.f32 %v1261, %v1325
      %1327 = vmatmul.f32.gmra.mxu0 %v777
      %v1328 = vpop.f32.mrf.mxu0
      %v1329 = vadd.f32 %v1264, %v1328
      %1330 = vdwg.mxu0
      %1331 = vmatpush.msra.mxu0 %v908
      %1332 = vmatpush.msra.mxu0 %v907
      %1333 = vmatpush.msra.mxu0 %v906
      %1334 = vmatpush.msra.mxu0 %v905
      %1335 = vmatpush.msra.mxu0 %v904
      %1336 = vmatpush.msra.mxu0 %v903
      %1337 = vmatpush.msra.mxu0 %v902
      %1338 = vmatpush.msra.mxu0 %v901
      %1339 = vmatpush.msra.mxu0 %v900
      %1340 = vmatpush.msra.mxu0 %v899
      %1341 = vmatpush.msra.mxu0 %v898
      %1342 = vmatpush.msra.mxu0 %v897
      %1343 = vmatpush.msra.mxu0 %v896
      %1344 = vmatpush.msra.mxu0 %v895
      %1345 = vmatpush.msra.mxu0 %v894
      %1346 = vmatpush.msra.mxu0 %v893
      %1347 = vmatmul.f32.gmra.mxu0 %v601
      %v1348 = vpop.f32.mrf.mxu0
      %v1349 = vadd.f32 %v1284, %v1348
      %1350 = vmatmul.f32.gmra.mxu0 %v602
      %v1351 = vpop.f32.mrf.mxu0
      %v1352 = vadd.f32 %v1287, %v1351
      %1353 = vmatmul.f32.gmra.mxu0 %v604
      %v1354 = vpop.f32.mrf.mxu0
      %v1355 = vadd.f32 %v1290, %v1354
      %1356 = vmatmul.f32.gmra.mxu0 %v605
      %v1357 = vpop.f32.mrf.mxu0
      %v1358 = vadd.f32 %v1293, %v1357
      %1359 = vmatmul.f32.gmra.mxu0 %v607
      %v1360 = vpop.f32.mrf.mxu0
      %v1361 = vadd.f32 %v1296, %v1360
      %1362 = vmatmul.f32.gmra.mxu0 %v608
      %v1363 = vpop.f32.mrf.mxu0
      %v1364 = vadd.f32 %v1299, %v1363
      %1365 = vmatmul.f32.gmra.mxu0 %v610
      %v1366 = vpop.f32.mrf.mxu0
      %v1367 = vadd.f32 %v1302, %v1366
      %1368 = vmatmul.f32.gmra.mxu0 %v611
      %v1369 = vpop.f32.mrf.mxu0
      %v1370 = vadd.f32 %v1305, %v1369
      %1371 = vmatmul.f32.gmra.mxu0 %v613
      %v1372 = vpop.f32.mrf.mxu0
      %v1373 = vadd.f32 %v1308, %v1372
      %1374 = vmatmul.f32.gmra.mxu0 %v614
      %v1375 = vpop.f32.mrf.mxu0
      %v1376 = vadd.f32 %v1311, %v1375
      %1377 = vmatmul.f32.gmra.mxu0 %v616
      %v1378 = vpop.f32.mrf.mxu0
      %v1379 = vadd.f32 %v1314, %v1378
      %1380 = vmatmul.f32.gmra.mxu0 %v617
      %v1381 = vpop.f32.mrf.mxu0
      %v1382 = vadd.f32 %v1317, %v1381
      %1383 = vmatmul.f32.gmra.mxu0 %v619
      %v1384 = vpop.f32.mrf.mxu0
      %v1385 = vadd.f32 %v1320, %v1384
      %1386 = vmatmul.f32.gmra.mxu0 %v620
      %v1387 = vpop.f32.mrf.mxu0
      %v1388 = vadd.f32 %v1323, %v1387
      %1389 = vmatmul.f32.gmra.mxu0 %v622
      %v1390 = vpop.f32.mrf.mxu0
      %v1391 = vadd.f32 %v1326, %v1390
      %1392 = vmatmul.f32.gmra.mxu0 %v623
      %v1393 = vpop.f32.mrf.mxu0
      %v1394 = vadd.f32 %v1329, %v1393
      %1395 = vdwg.mxu0
      %1396 = vmatpush.msra.mxu0 %v924
      %1397 = vmatpush.msra.mxu0 %v923
      %1398 = vmatpush.msra.mxu0 %v922
      %1399 = vmatpush.msra.mxu0 %v921
      %1400 = vmatpush.msra.mxu0 %v920
      %1401 = vmatpush.msra.mxu0 %v919
      %1402 = vmatpush.msra.mxu0 %v918
      %1403 = vmatpush.msra.mxu0 %v917
      %1404 = vmatpush.msra.mxu0 %v916
      %1405 = vmatpush.msra.mxu0 %v915
      %1406 = vmatpush.msra.mxu0 %v914
      %1407 = vmatpush.msra.mxu0 %v913
      %1408 = vmatpush.msra.mxu0 %v912
      %1409 = vmatpush.msra.mxu0 %v911
      %1410 = vmatpush.msra.mxu0 %v910
      %1411 = vmatpush.msra.mxu0 %v909
      %1412 = vmatmul.f32.gmra.mxu0 %v662
      %v1413 = vpop.f32.mrf.mxu0
      %v1414 = vadd.f32 %v1349, %v1413
      %1415 = vmatmul.f32.gmra.mxu0 %v664
      %v1416 = vpop.f32.mrf.mxu0
      %v1417 = vadd.f32 %v1352, %v1416
      %1418 = vmatmul.f32.gmra.mxu0 %v667
      %v1419 = vpop.f32.mrf.mxu0
      %v1420 = vadd.f32 %v1355, %v1419
      %1421 = vmatmul.f32.gmra.mxu0 %v669
      %v1422 = vpop.f32.mrf.mxu0
      %v1423 = vadd.f32 %v1358, %v1422
      %1424 = vmatmul.f32.gmra.mxu0 %v672
      %v1425 = vpop.f32.mrf.mxu0
      %v1426 = vadd.f32 %v1361, %v1425
      %1427 = vmatmul.f32.gmra.mxu0 %v674
      %v1428 = vpop.f32.mrf.mxu0
      %v1429 = vadd.f32 %v1364, %v1428
      %1430 = vmatmul.f32.gmra.mxu0 %v677
      %v1431 = vpop.f32.mrf.mxu0
      %v1432 = vadd.f32 %v1367, %v1431
      %1433 = vmatmul.f32.gmra.mxu0 %v679
      %v1434 = vpop.f32.mrf.mxu0
      %v1435 = vadd.f32 %v1370, %v1434
      %1436 = vmatmul.f32.gmra.mxu0 %v682
      %v1437 = vpop.f32.mrf.mxu0
      %v1438 = vadd.f32 %v1373, %v1437
      %1439 = vmatmul.f32.gmra.mxu0 %v684
      %v1440 = vpop.f32.mrf.mxu0
      %v1441 = vadd.f32 %v1376, %v1440
      %1442 = vmatmul.f32.gmra.mxu0 %v687
      %v1443 = vpop.f32.mrf.mxu0
      %v1444 = vadd.f32 %v1379, %v1443
      %1445 = vmatmul.f32.gmra.mxu0 %v689
      %v1446 = vpop.f32.mrf.mxu0
      %v1447 = vadd.f32 %v1382, %v1446
      %1448 = vmatmul.f32.gmra.mxu0 %v768
      %v1449 = vpop.f32.mrf.mxu0
      %v1450 = vadd.f32 %v1385, %v1449
      %1451 = vmatmul.f32.gmra.mxu0 %v770
      %v1452 = vpop.f32.mrf.mxu0
      %v1453 = vadd.f32 %v1388, %v1452
      %1454 = vmatmul.f32.gmra.mxu0 %v785
      %v1455 = vpop.f32.mrf.mxu0
      %v1456 = vadd.f32 %v1391, %v1455
      %1457 = vmatmul.f32.gmra.mxu0 %v787
      %v1458 = vpop.f32.mrf.mxu0
      %v1459 = vadd.f32 %v1394, %v1458
      %1460 = vdwg.mxu0
      %1461 = vmatpush.msra.mxu0 %v940
      %1462 = vmatpush.msra.mxu0 %v939
      %1463 = vmatpush.msra.mxu0 %v938
      %1464 = vmatpush.msra.mxu0 %v937
      %1465 = vmatpush.msra.mxu0 %v936
      %1466 = vmatpush.msra.mxu0 %v935
      %1467 = vmatpush.msra.mxu0 %v934
      %1468 = vmatpush.msra.mxu0 %v933
      %1469 = vmatpush.msra.mxu0 %v932
      %1470 = vmatpush.msra.mxu0 %v931
      %1471 = vmatpush.msra.mxu0 %v930
      %1472 = vmatpush.msra.mxu0 %v929
      %1473 = vmatpush.msra.mxu0 %v928
      %1474 = vmatpush.msra.mxu0 %v927
      %1475 = vmatpush.msra.mxu0 %v926
      %1476 = vmatpush.msra.mxu0 %v925
      %1477 = vmatmul.f32.gmra.mxu0 %v719
      %v1478 = vpop.f32.mrf.mxu0
      %v1479 = vadd.f32 %v1414, %v1478
      %1480 = vmatmul.f32.gmra.mxu0 %v721
      %v1481 = vpop.f32.mrf.mxu0
      %v1482 = vadd.f32 %v1417, %v1481
      %1483 = vmatmul.f32.gmra.mxu0 %v724
      %v1484 = vpop.f32.mrf.mxu0
      %v1485 = vadd.f32 %v1420, %v1484
      %1486 = vmatmul.f32.gmra.mxu0 %v726
      %v1487 = vpop.f32.mrf.mxu0
      %v1488 = vadd.f32 %v1423, %v1487
      %1489 = vmatmul.f32.gmra.mxu0 %v729
      %v1490 = vpop.f32.mrf.mxu0
      %v1491 = vadd.f32 %v1426, %v1490
      %1492 = vmatmul.f32.gmra.mxu0 %v731
      %v1493 = vpop.f32.mrf.mxu0
      %v1494 = vadd.f32 %v1429, %v1493
      %1495 = vmatmul.f32.gmra.mxu0 %v734
      %v1496 = vpop.f32.mrf.mxu0
      %v1497 = vadd.f32 %v1432, %v1496
      %1498 = vmatmul.f32.gmra.mxu0 %v736
      %v1499 = vpop.f32.mrf.mxu0
      %v1500 = vadd.f32 %v1435, %v1499
      %1501 = vmatmul.f32.gmra.mxu0 %v739
      %v1502 = vpop.f32.mrf.mxu0
      %v1503 = vadd.f32 %v1438, %v1502
      %1504 = vmatmul.f32.gmra.mxu0 %v741
      %v1505 = vpop.f32.mrf.mxu0
      %v1506 = vadd.f32 %v1441, %v1505
      %1507 = vmatmul.f32.gmra.mxu0 %v744
      %v1508 = vpop.f32.mrf.mxu0
      %v1509 = vadd.f32 %v1444, %v1508
      %1510 = vmatmul.f32.gmra.mxu0 %v746
      %v1511 = vpop.f32.mrf.mxu0
      %v1512 = vadd.f32 %v1447, %v1511
      %1513 = vmatmul.f32.gmra.mxu0 %v775
      %v1514 = vpop.f32.mrf.mxu0
      %v1515 = vadd.f32 %v1450, %v1514
      %1516 = vmatmul.f32.gmra.mxu0 %v777
      %v1517 = vpop.f32.mrf.mxu0
      %v1518 = vadd.f32 %v1453, %v1517
      %1519 = vmatmul.f32.gmra.mxu0 %v792
      %v1520 = vpop.f32.mrf.mxu0
      %v1521 = vadd.f32 %v1456, %v1520
      %1522 = vmatmul.f32.gmra.mxu0 %v794
      %v1523 = vpop.f32.mrf.mxu0
      %v1524 = vadd.f32 %v1459, %v1523
      %1525 = vdwg.mxu0
      %p1526 = scmp.eq.s32.totalorder %s21, 0
      %p1527 = scmp.eq.s32.totalorder %s22, 0
      %p1528 = pnand %p1526, %p1527
      %p1529 = pneg %p1528
      // Predicated region
      $region55: #{residual_forward.4} parent=31 // pred_check
        _
      $region56: #{residual_forward.4} parent=31 // pred_check_branch
        %1531 = sbr.rel (%p1528) target = $region58
      $region57: #{residual_forward.4} parent=31 // pred_region
        %1532 = vst [vmem:[%s5] sm:$0x3] 0.0
      $region58: #{residual_forward.4} parent=31 // pred_fallthru
        _
      %v1533 = vld [vmem:[%s5] sm:$0x3]
      %v1534 = vadd.f32 %v1479, %v1482
      %v1535 = vadd.f32 %v1534, %v1485
      %v1536 = vadd.f32 %v1535, %v1488
      %v1537 = vadd.f32 %v1536, %v1491
      %v1538 = vadd.f32 %v1537, %v1494
      %v1539 = vadd.f32 %v1538, %v1497
      %v1540 = vadd.f32 %v1539, %v1500
      %v1541 = vadd.f32 %v1540, %v1503
      %v1542 = vadd.f32 %v1541, %v1506
      %v1543 = vadd.f32 %v1542, %v1509
      %v1544 = vadd.f32 %v1543, %v1512
      %v1545 = vadd.f32 %v1544, %v1515
      %v1546 = vadd.f32 %v1545, %v1518
      %v1547 = vadd.f32 %v1546, %v1521
      %v1548 = vadd.f32 %v1547, %v1524
      %v1549 = vrot.slane %v1548, 4
      %v1550 = vadd.f32 %v1548, %v1549
      %v1551 = vrot.slane %v1550, 2
      %v1552 = vadd.f32 %v1550, %v1551
      %v1553 = vrot.slane %v1552, 1
      %v1554 = vadd.f32 %v1552, %v1553
      %v1555 = vmul.f32 %v1479, %v1479
      %v1556 = vmul.f32 %v1482, %v1482
      %v1557 = vmul.f32 %v1485, %v1485
      %v1558 = vmul.f32 %v1488, %v1488
      %v1559 = vmul.f32 %v1491, %v1491
      %v1560 = vmul.f32 %v1494, %v1494
      %v1561 = vmul.f32 %v1497, %v1497
      %v1562 = vmul.f32 %v1500, %v1500
      %v1563 = vmul.f32 %v1503, %v1503
      %v1564 = vmul.f32 %v1506, %v1506
      %v1565 = vmul.f32 %v1509, %v1509
      %v1566 = vmul.f32 %v1512, %v1512
      %v1567 = vmul.f32 %v1515, %v1515
      %v1568 = vmul.f32 %v1518, %v1518
      %v1569 = vmul.f32 %v1521, %v1521
      %v1570 = vmul.f32 %v1524, %v1524
      %v1571 = vadd.f32 %v1555, %v1556
      %v1572 = vadd.f32 %v1571, %v1557
      %v1573 = vadd.f32 %v1572, %v1558
      %v1574 = vadd.f32 %v1573, %v1559
      %v1575 = vadd.f32 %v1574, %v1560
      %v1576 = vadd.f32 %v1575, %v1561
      %v1577 = vadd.f32 %v1576, %v1562
      %v1578 = vadd.f32 %v1577, %v1563
      %v1579 = vadd.f32 %v1578, %v1564
      %v1580 = vadd.f32 %v1579, %v1565
      %v1581 = vadd.f32 %v1580, %v1566
      %v1582 = vadd.f32 %v1581, %v1567
      %v1583 = vadd.f32 %v1582, %v1568
      %v1584 = vadd.f32 %v1583, %v1569
      %v1585 = vadd.f32 %v1584, %v1570
      %v1586 = vrot.slane %v1585, 4
      %v1587 = vadd.f32 %v1585, %v1586
      %v1588 = vrot.slane %v1587, 2
      %v1589 = vadd.f32 %v1587, %v1588
      %v1590 = vrot.slane %v1589, 1
      %v1591 = vadd.f32 %v1589, %v1590
      %vm1592 = vcmask 1040384
      %v1593 = vsel %vm1592, %v1554, %v1591
      %v1594 = vadd.f32 %v1533, %v1593
      %1595 = vst [vmem:[%s5] sm:$0x3] %v1594
      %1596 = vst [vmem:[%s200] sm:$0xff] %v1479
      %1597 = vst [vmem:[%s200 + $0x8] sm:$0xff] %v1482
      %1598 = vst [vmem:[%s200 + $0x10] sm:$0xff] %v1485
      %1599 = vst [vmem:[%s200 + $0x18] sm:$0xff] %v1488
      %1600 = vst [vmem:[%s200 + $0x20] sm:$0xff] %v1491
      %1601 = vst [vmem:[%s200 + $0x28] sm:$0xff] %v1494
      %1602 = vst [vmem:[%s200 + $0x30] sm:$0xff] %v1497
      %1603 = vst [vmem:[%s200 + $0x38] sm:$0xff] %v1500
      %1604 = vst [vmem:[%s200 + $0x40] sm:$0xff] %v1503
      %1605 = vst [vmem:[%s200 + $0x48] sm:$0xff] %v1506
      %1606 = vst [vmem:[%s200 + $0x50] sm:$0xff] %v1509
      %1607 = vst [vmem:[%s200 + $0x58] sm:$0xff] %v1512
      %1608 = vst [vmem:[%s200 + $0x60] sm:$0xff] %v1515
      %1609 = vst [vmem:[%s200 + $0x68] sm:$0xff] %v1518
      %1610 = vst [vmem:[%s200 + $0x70] sm:$0xff] %v1521
      %1611 = vst [vmem:[%s200 + $0x78] sm:$0xff] %v1524
      %s1612 = smul.u32 8, %s22
      %p1613 = scmp.lt.s32.totalorder %s21, 1
      %s1614 = scalar_select %p1613, %s21, 1
      %p1615 = scmp.lt.s32.totalorder %s1612, 15
      %s1616 = scalar_select %p1615, %s1612, 15
      %s1617 = smul.addr %s1616, 2
      %s1618 = smul.addr %s1614, 32
      %s1619 = sadd.s32 %s1617, %s1618
      %s1620 = smul.addr %s1619, 8
      %s1621 = scalar_lea.vmem %s4, %s1620
      // Predicated region
      $region59: #{residual_forward.4} parent=31 // pred_check
        %p1622 = pneg %p112
      $region60: #{residual_forward.4} parent=31 // pred_check_branch
        %1624 = sbr.rel (%p1622) target = $region62
      $region61: #{residual_forward.4} parent=31 // pred_region
        %s1625 = smul.u32 8, %s22
      $region62: #{residual_forward.4} parent=31 // pred_fallthru
        _
      // Predicated region
      $region63: #{residual_forward.4} parent=31 // pred_check
        %p1626 = pneg %p133
      $region64: #{residual_forward.4} parent=31 // pred_check_branch
        %1628 = sbr.rel (%p1626) target = $region66
      $region65: #{residual_forward.4} parent=31 // pred_region
        _
      $region66: #{residual_forward.4} parent=31 // pred_fallthru
        _
      // Predicated region
      $region67: #{residual_forward.4} parent=31 // pred_check
        %p1629 = pneg %p133
      $region68: #{residual_forward.4} parent=31 // pred_check_branch
        %1631 = sbr.rel (%p1629) target = $region70
      $region69: #{residual_forward.4} parent=31 // pred_region
        _
      $region70: #{residual_forward.4} parent=31 // pred_fallthru
        _
    $region32: #{residual_forward.4} parent=5 // pred_fallthru
      _
    %p1632 = scmp.le.s32.totalorder 2, %s12
    // Predicated region
    $region71: #{residual_forward.4} parent=5 // pred_check
      %p1633 = pneg %p1632
    $region72: #{residual_forward.4} parent=5 // pred_check_branch
      %1635 = sbr.rel (%p1633) target = $region74
    $region73: #{residual_forward.4} parent=5 // pred_region
      %s1636 = ssub.s32 %s12, 2
      // Predicated region
      $region75: #{residual_forward.4} parent=73 // pred_check
        %p1637 = pneg %p118
      $region76: #{residual_forward.4} parent=73 // pred_check_branch
        %1639 = sbr.rel (%p1637) target = $region78
      $region77: #{residual_forward.4} parent=73 // pred_region
        %s1640 = smul.u32 8, %s24
        %p1641 = scmp.lt.s32.totalorder %s23, 1
        %s1642 = scalar_select %p1641, %s23, 1
        %p1643 = scmp.lt.s32.totalorder %s1640, 15
        %s1644 = scalar_select %p1643, %s1640, 15
        %s1645 = smul.addr %s1644, 2
        %s1646 = smul.addr %s1642, 32
        %s1647 = sadd.s32 %s1645, %s1646
        %s1648 = smul.addr %s1647, 8
        %s1649 = scalar_lea.vmem %s4, %s1648
      $region78: #{residual_forward.4} parent=73 // pred_fallthru
        _
    $region74: #{residual_forward.4} parent=5 // pred_fallthru
      _
  $region6: #{residual_forward.4} parent=0 // loop_footer
    %s16 = sadd.s32 1, %s12
  $region7: #{residual_forward.4} parent=0 // loop_footer_branch
    %11 = sbr.rel target = $region3
  $region8: #{residual_forward.4} parent=0 // loop_exit
    _
  %1650 = vsyncmov [#allocation3]
  %s1651 = vpop.sfrf %1650
  %p1652 = scmp.eq.s32.totalorder %s1651, 0
  %p1653 = pneg %p1652
  %1655 = shalt.err (%p1653)

</llo_original>
